<compile_context>
chip_gen: v7x
topology: tpu7x:2x2x1
jax: 0.10.0
libtpu: 0.0.40
codegen_flags: <defaults>
</compile_context>

<pallas_src>
import functools
import math

import jax
import jax.numpy as jnp
from jax import lax
from jax.experimental import pallas as pl
from jax.experimental.pallas import tpu as pltpu


# --------------------------------------------------------------------------- #
# Pallas kernel: one batch element per grid step                               #
# --------------------------------------------------------------------------- #
def _act_encoder_layer_kernel(
    x_ref, pos_ref, w_attn_ref, w_ffn_ref, vec_ref, o_ref,
    *, n_heads, d_model, d_ff, eps,
):
    D, FF = d_model, d_ff
    hd = D // n_heads
    scale = 1.0 / math.sqrt(hd)

    x = x_ref[0].astype(jnp.float32)        # (S, D)
    pos = pos_ref[0].astype(jnp.float32)    # (S, D)

    # ---- unpack parameter slabs (static slices of VMEM-resident blocks) ----
    w_attn = w_attn_ref[...]                # (D, 4D) bf16: [wq | wk | wv | wo]
    w_qk = w_attn[:, : 2 * D]               # fused Q/K projection weight
    w_v = w_attn[:, 2 * D: 3 * D]
    w_o = w_attn[:, 3 * D: 4 * D]
    w1 = w_ffn_ref[0:D, 0:FF]               # (D, FF)  bf16
    w2 = w_ffn_ref[D: D + FF, 0:D]          # (FF, D)  bf16

    def vec(row, width):                    # (1, width) f32 row of the bias slab
        return vec_ref[row: row + 1, 0:width]

    bq, bk, bv, bo = vec(0, D), vec(1, D), vec(2, D), vec(3, D)
    g1, beta1 = vec(4, D), vec(5, D)
    b1, b2 = vec(6, FF), vec(7, D)
    g2, beta2 = vec(8, D), vec(9, D)

    # ---- self attention: q = k = x + pos_embed, value = x ------------------
    qk_in = (x + pos).astype(jnp.bfloat16)
    qk = jnp.dot(qk_in, w_qk, preferred_element_type=jnp.float32)   # (S, 2D)
    q = qk[:, :D] + bq
    k = qk[:, D:] + bk
    v = jnp.dot(x.astype(jnp.bfloat16), w_v,
                preferred_element_type=jnp.float32) + bv

    ctx_parts = []
    for h in range(n_heads):                # static unroll over heads
        sl = slice(h * hd, (h + 1) * hd)
        qh = (q[:, sl] * scale).astype(jnp.bfloat16)
        kh = k[:, sl].astype(jnp.bfloat16)
        # contract dim 1 of both operands: no materialized transpose of k
        s = lax.dot_general(qh, kh, (((1,), (1,)), ((), ())),
                            preferred_element_type=jnp.float32)      # (S, S)
        s = s - jnp.max(s, axis=-1, keepdims=True)
        p = jnp.exp(s)
        p = p * pl.reciprocal(jnp.sum(p, axis=-1, keepdims=True), approx=True)
        ctx_parts.append(
            jnp.dot(p.astype(jnp.bfloat16), v[:, sl].astype(jnp.bfloat16),
                    preferred_element_type=jnp.float32))             # (S, hd)
    ctx = jnp.concatenate(ctx_parts, axis=-1)                        # (S, D)
    attn = jnp.dot(ctx.astype(jnp.bfloat16), w_o,
                   preferred_element_type=jnp.float32) + bo

    # ---- residual + norm1 (post-norm; dropout1 identity in eval) -----------
    x1 = x + attn
    mu1 = jnp.mean(x1, axis=-1, keepdims=True)
    var1 = jnp.mean((x1 - mu1) ** 2, axis=-1, keepdims=True)
    xn = (x1 - mu1) * lax.rsqrt(var1 + eps) * g1 + beta1

    # ---- feed-forward: linear2(relu(linear1(x))) ----------------------------
    h1 = jnp.dot(xn.astype(jnp.bfloat16), w1,
                 preferred_element_type=jnp.float32) + b1
    h1 = jnp.maximum(h1, 0.0)
    h2 = jnp.dot(h1.astype(jnp.bfloat16), w2,
                 preferred_element_type=jnp.float32) + b2

    # ---- residual + norm2 ----------------------------------------------------
    x2 = xn + h2
    mu2 = jnp.mean(x2, axis=-1, keepdims=True)
    var2 = jnp.mean((x2 - mu2) ** 2, axis=-1, keepdims=True)
    out = (x2 - mu2) * lax.rsqrt(var2 + eps) * g2 + beta2

    o_ref[0] = out.astype(o_ref.dtype)


# --------------------------------------------------------------------------- #
# Wrapper: packs parameters into 3 slabs and runs a per-batch parallel grid   #
# --------------------------------------------------------------------------- #
def act_encoder_layer(x_sbd, pos_sbd, params, *, n_heads, eps=1e-5):
    """x_sbd / pos_sbd: (S, B, D) float32 (PyTorch MHA convention: seq, batch, dim)."""
    S, B, D = x_sbd.shape
    FF = params["w1"].shape[1]
    VW = max(D, FF)

    # Per-batch token slabs: (B, S, D) so each grid step DMAs one contiguous
    # (1, S, D) block.  The transpose is a few KB of XLA work outside the kernel.
    x_bsd = jnp.transpose(x_sbd, (1, 0, 2))
    pos_bsd = jnp.transpose(pos_sbd, (1, 0, 2))

    # Weight slab 1: all attention weights, bf16, one DMA.
    w_attn = jnp.concatenate(
        [params["wq"], params["wk"], params["wv"], params["wo"]], axis=1
    ).astype(jnp.bfloat16)                                           # (D, 4D)

    # Weight slab 2: both FFN weights stacked along rows, bf16, one DMA.
    w1p = jnp.pad(params["w1"], ((0, 0), (0, VW - FF)))
    w2p = jnp.pad(params["w2"], ((0, 0), (0, VW - D)))
    w_ffn = jnp.concatenate([w1p, w2p], axis=0).astype(jnp.bfloat16)  # (D+FF, VW)

    # Slab 3: all bias / gamma / beta vectors, f32, one DMA.
    def row(v):
        v = v.reshape(1, -1)
        return jnp.pad(v, ((0, 0), (0, VW - v.shape[1])))

    vec_pack = jnp.concatenate(
        [row(params["bq"]), row(params["bk"]), row(params["bv"]), row(params["bo"]),
         row(params["g1"]), row(params["beta1"]),
         row(params["b1"]), row(params["b2"]),
         row(params["g2"]), row(params["beta2"])], axis=0
    ).astype(jnp.float32)                                             # (10, VW)

    tok_spec = pl.BlockSpec((1, S, D), lambda b: (b, 0, 0))
    w_attn_spec = pl.BlockSpec((D, 4 * D), lambda b: (0, 0))          # constant ->
    w_ffn_spec = pl.BlockSpec((D + FF, VW), lambda b: (0, 0))         # fetched once,
    vec_spec = pl.BlockSpec((10, VW), lambda b: (0, 0))               # VMEM-resident

    out_bsd = pl.pallas_call(
        functools.partial(_act_encoder_layer_kernel,
                          n_heads=n_heads, d_model=D, d_ff=FF, eps=eps),
        out_shape=jax.ShapeDtypeStruct((B, S, D), x_sbd.dtype),
        grid=(B,),
        in_specs=[tok_spec, tok_spec, w_attn_spec, w_ffn_spec, vec_spec],
        out_specs=tok_spec,
        compiler_params=pltpu.CompilerParams(
            dimension_semantics=("parallel",)),                       # v7x: 2 TCs
    )(x_bsd, pos_bsd, w_attn, w_ffn, vec_pack)

    return jnp.transpose(out_bsd, (1, 0, 2))


# --------------------------------------------------------------------------- #
# Pure-JAX f32 reference (mirrors torch.nn.MultiheadAttention + post-norm)     #
# --------------------------------------------------------------------------- #
def reference(x, pos, p, n_heads, eps=1e-5):
    S, B, D = x.shape
    hd = D // n_heads
    qk = x + pos
    q = qk @ p["wq"] + p["bq"]
    k = qk @ p["wk"] + p["bk"]
    v = x @ p["wv"] + p["bv"]

    def split(t):
        return t.reshape(S, B, n_heads, hd).transpose(1, 2, 0, 3)  # (B,H,S,hd)

    qh, kh, vh = split(q), split(k), split(v)
    s = jnp.einsum("bhqd,bhkd->bhqk", qh, kh) / math.sqrt(hd)
    a = jax.nn.softmax(s, axis=-1)
    o = jnp.einsum("bhqk,bhkd->bhqd", a, vh).transpose(2, 0, 1, 3).reshape(S, B, D)
    attn = o @ p["wo"] + p["bo"]

    def ln(t, g, b):
        mu = t.mean(-1, keepdims=True)
        var = ((t - mu) ** 2).mean(-1, keepdims=True)
        return (t - mu) / jnp.sqrt(var + eps) * g + b

    x1 = ln(x + attn, p["g1"], p["beta1"])
    h = jnp.maximum(x1 @ p["w1"] + p["b1"], 0.0)
    h = h @ p["w2"] + p["b2"]
    return ln(x1 + h, p["g2"], p["beta2"])


# --------------------------------------------------------------------------- #
# Main                                                                        #
# --------------------------------------------------------------------------- #
if __name__ == "__main__":
    # config: dim_model=32, n_heads=4, dim_feedforward=64, dropout=0 (eval),
    #         activation='relu', pre_norm=False
    D, H, FF = 32, 4, 64
    S, B = 8, 2

    key = jax.random.PRNGKey(0)
    keys = jax.random.split(key, 16)

    def rnd(k, shape, scale=0.1):
        return (scale * jax.random.normal(k, shape)).astype(jnp.float32)

    # nn.MultiheadAttention packed in_proj_weight is (3D, D); weights here are
    # pre-split and pre-transposed so the kernel does x @ W (W == torch_W.T).
    params = {
        "wq": rnd(keys[0], (D, D)), "wk": rnd(keys[1], (D, D)), "wv": rnd(keys[2], (D, D)),
        "bq": rnd(keys[3], (1, D)), "bk": rnd(keys[4], (1, D)), "bv": rnd(keys[5], (1, D)),
        "wo": rnd(keys[6], (D, D)), "bo": rnd(keys[7], (1, D)),
        "g1": jnp.ones((1, D), jnp.float32), "beta1": jnp.zeros((1, D), jnp.float32),
        "w1": rnd(keys[8], (D, FF)), "b1": rnd(keys[9], (1, FF)),
        "w2": rnd(keys[10], (FF, D)), "b2": rnd(keys[11], (1, D)),
        "g2": jnp.ones((1, D), jnp.float32), "beta2": jnp.zeros((1, D), jnp.float32),
    }

    x = rnd(keys[12], (S, B, D), scale=1.0)
    pos = rnd(keys[13], (S, B, D), scale=0.5)

    layer = jax.jit(functools.partial(act_encoder_layer, n_heads=H))
    out = jax.block_until_ready(layer(x, pos, params))

    ref = reference(x, pos, params, n_heads=H)
    assert out.shape == (S, B, D)
    err = float(jnp.max(jnp.abs(out - ref)))
    # Tolerance reflects bf16 MXU inputs (f32 accumulation) plus the EUP
    # approximate reciprocal in the softmax denominator; elementwise math is f32.
    assert jnp.allclose(out, ref, atol=5e-2, rtol=5e-2), err
    print("KERNEL_OK")
</pallas_src>

<mosaic_0001>
module attributes {stable_mosaic.version = 11 : i64} {
  func.func @_act_encoder_layer_kernel(%arg0: i32, %arg1: memref<1x8x32xf32, #tpu.memory_space<vmem>>, %arg2: memref<1x8x32xf32, #tpu.memory_space<vmem>>, %arg3: memref<32x128xbf16, #tpu.memory_space<vmem>>, %arg4: memref<96x64xbf16, #tpu.memory_space<vmem>>, %arg5: memref<10x64xf32, #tpu.memory_space<vmem>>, %arg6: memref<1x8x32xf32, #tpu.memory_space<vmem>>) attributes {dimension_semantics = [#tpu.dimension_semantics<parallel>], iteration_bounds = array<i64: 2>, scalar_prefetch = 0 : i64, scratch_operands = 0 : i64, tpu.core_type = #tpu.core_type<tc>, window_params = [{transform_indices = @transform_0, window_bounds = array<i64: 1, 8, 32>}, {transform_indices = @transform_1, window_bounds = array<i64: 1, 8, 32>}, {pipeline_mode = #tpu.pipeline_mode<synchronous>, transform_indices = @transform_2, window_bounds = array<i64: 32, 128>}, {pipeline_mode = #tpu.pipeline_mode<synchronous>, transform_indices = @transform_3, window_bounds = array<i64: 96, 64>}, {pipeline_mode = #tpu.pipeline_mode<synchronous>, transform_indices = @transform_4, window_bounds = array<i64: 10, 64>}, {transform_indices = @transform_5, window_bounds = array<i64: 1, 8, 32>}]} {
    %c0 = arith.constant 0 : index
    %c0_0 = arith.constant 0 : index
    %c0_1 = arith.constant 0 : index
    %0 = vector.load %arg1[%c0, %c0_0, %c0_1] : memref<1x8x32xf32, #tpu.memory_space<vmem>>, vector<1x8x32xf32>
    %1 = vector.shape_cast %0 : vector<1x8x32xf32> to vector<8x32xf32>
    %c0_2 = arith.constant 0 : index
    %c0_3 = arith.constant 0 : index
    %c0_4 = arith.constant 0 : index
    %2 = vector.load %arg2[%c0_2, %c0_3, %c0_4] : memref<1x8x32xf32, #tpu.memory_space<vmem>>, vector<1x8x32xf32>
    %3 = vector.shape_cast %2 : vector<1x8x32xf32> to vector<8x32xf32>
    %c0_5 = arith.constant 0 : index
    %c0_6 = arith.constant 0 : index
    %4 = vector.load %arg3[%c0_5, %c0_6] : memref<32x128xbf16, #tpu.memory_space<vmem>>, vector<32x128xbf16>
    %5 = vector.extract_strided_slice %4 {offsets = [0, 0], sizes = [32, 64], strides = [1, 1]} : vector<32x128xbf16> to vector<32x64xbf16>
    %6 = vector.extract_strided_slice %4 {offsets = [0, 64], sizes = [32, 32], strides = [1, 1]} : vector<32x128xbf16> to vector<32x32xbf16>
    %7 = vector.extract_strided_slice %4 {offsets = [0, 96], sizes = [32, 32], strides = [1, 1]} : vector<32x128xbf16> to vector<32x32xbf16>
    %c0_7 = arith.constant 0 : index
    %c0_8 = arith.constant 0 : index
    %8 = vector.load %arg4[%c0_7, %c0_8] : memref<96x64xbf16, #tpu.memory_space<vmem>>, vector<32x64xbf16>
    %c32 = arith.constant 32 : index
    %c0_9 = arith.constant 0 : index
    %9 = vector.load %arg4[%c32, %c0_9] : memref<96x64xbf16, #tpu.memory_space<vmem>>, vector<64x32xbf16>
    %c0_10 = arith.constant 0 : index
    %c0_11 = arith.constant 0 : index
    %10 = vector.load %arg5[%c0_10, %c0_11] : memref<10x64xf32, #tpu.memory_space<vmem>>, vector<1x32xf32>
    %c1 = arith.constant 1 : index
    %c0_12 = arith.constant 0 : index
    %11 = vector.load %arg5[%c1, %c0_12] : memref<10x64xf32, #tpu.memory_space<vmem>>, vector<1x32xf32>
    %c2 = arith.constant 2 : index
    %c0_13 = arith.constant 0 : index
    %12 = vector.load %arg5[%c2, %c0_13] : memref<10x64xf32, #tpu.memory_space<vmem>>, vector<1x32xf32>
    %c3 = arith.constant 3 : index
    %c0_14 = arith.constant 0 : index
    %13 = vector.load %arg5[%c3, %c0_14] : memref<10x64xf32, #tpu.memory_space<vmem>>, vector<1x32xf32>
    %c4 = arith.constant 4 : index
    %c0_15 = arith.constant 0 : index
    %14 = vector.load %arg5[%c4, %c0_15] : memref<10x64xf32, #tpu.memory_space<vmem>>, vector<1x32xf32>
    %c5 = arith.constant 5 : index
    %c0_16 = arith.constant 0 : index
    %15 = vector.load %arg5[%c5, %c0_16] : memref<10x64xf32, #tpu.memory_space<vmem>>, vector<1x32xf32>
    %c6 = arith.constant 6 : index
    %c0_17 = arith.constant 0 : index
    %16 = vector.load %arg5[%c6, %c0_17] : memref<10x64xf32, #tpu.memory_space<vmem>>, vector<1x64xf32>
    %c7 = arith.constant 7 : index
    %c0_18 = arith.constant 0 : index
    %17 = vector.load %arg5[%c7, %c0_18] : memref<10x64xf32, #tpu.memory_space<vmem>>, vector<1x32xf32>
    %c8 = arith.constant 8 : index
    %c0_19 = arith.constant 0 : index
    %18 = vector.load %arg5[%c8, %c0_19] : memref<10x64xf32, #tpu.memory_space<vmem>>, vector<1x32xf32>
    %c9 = arith.constant 9 : index
    %c0_20 = arith.constant 0 : index
    %19 = vector.load %arg5[%c9, %c0_20] : memref<10x64xf32, #tpu.memory_space<vmem>>, vector<1x32xf32>
    %20 = arith.addf %1, %3 : vector<8x32xf32>
    %21 = arith.truncf %20 : vector<8x32xf32> to vector<8x32xbf16>
    %cst = arith.constant dense<0.000000e+00> : vector<8x64xf32>
    %22 = tpu.matmul %21, %5, %cst {dimension_numbers = #tpu.dot_dimension_numbers<[1], [0], [0], [1], [0, 0, 1, 1], [], []>} : vector<8x32xbf16>, vector<32x64xbf16>, vector<8x64xf32> -> vector<8x64xf32>
    %23 = vector.extract_strided_slice %22 {offsets = [0, 0], sizes = [8, 32], strides = [1, 1]} : vector<8x64xf32> to vector<8x32xf32>
    %24 = vector.broadcast %10 : vector<1x32xf32> to vector<8x32xf32>
    %25 = arith.addf %23, %24 : vector<8x32xf32>
    %26 = vector.extract_strided_slice %22 {offsets = [0, 32], sizes = [8, 32], strides = [1, 1]} : vector<8x64xf32> to vector<8x32xf32>
    %27 = vector.broadcast %11 : vector<1x32xf32> to vector<8x32xf32>
    %28 = arith.addf %26, %27 : vector<8x32xf32>
    %29 = arith.truncf %1 : vector<8x32xf32> to vector<8x32xbf16>
    %cst_21 = arith.constant dense<0.000000e+00> : vector<8x32xf32>
    %30 = tpu.matmul %29, %6, %cst_21 {dimension_numbers = #tpu.dot_dimension_numbers<[1], [0], [0], [1], [0, 0, 1, 1], [], []>} : vector<8x32xbf16>, vector<32x32xbf16>, vector<8x32xf32> -> vector<8x32xf32>
    %31 = vector.broadcast %12 : vector<1x32xf32> to vector<8x32xf32>
    %32 = arith.addf %30, %31 : vector<8x32xf32>
    %33 = vector.extract_strided_slice %25 {offsets = [0, 0], sizes = [8, 8], strides = [1, 1]} : vector<8x32xf32> to vector<8x8xf32>
    %cst_22 = arith.constant 0.353553385 : f32
    %34 = vector.broadcast %cst_22 : f32 to vector<8x8xf32>
    %35 = arith.mulf %33, %34 : vector<8x8xf32>
    %36 = arith.truncf %35 : vector<8x8xf32> to vector<8x8xbf16>
    %37 = vector.extract_strided_slice %28 {offsets = [0, 0], sizes = [8, 8], strides = [1, 1]} : vector<8x32xf32> to vector<8x8xf32>
    %38 = arith.truncf %37 : vector<8x8xf32> to vector<8x8xbf16>
    %cst_23 = arith.constant dense<0.000000e+00> : vector<8x8xf32>
    %39 = tpu.matmul %36, %38, %cst_23 {dimension_numbers = #tpu.dot_dimension_numbers<[1], [1], [0], [0], [0, 0, 1, 0], [], []>} : vector<8x8xbf16>, vector<8x8xbf16>, vector<8x8xf32> -> vector<8x8xf32>
    %cst_24 = arith.constant dense<0xFF800000> : vector<8xf32>
    %40 = vector.multi_reduction <maximumf>, %39, %cst_24 [1] : vector<8x8xf32> to vector<8xf32>
    %41 = vector.shape_cast %40 : vector<8xf32> to vector<8x1xf32>
    %42 = vector.broadcast %41 : vector<8x1xf32> to vector<8x8xf32>
    %43 = arith.subf %39, %42 : vector<8x8xf32>
    %44 = math.exp %43 : vector<8x8xf32>
    %cst_25 = arith.constant dense<0.000000e+00> : vector<8xf32>
    %45 = vector.multi_reduction <add>, %44, %cst_25 [1] : vector<8x8xf32> to vector<8xf32>
    %46 = vector.shape_cast %45 : vector<8xf32> to vector<8x1xf32>
    %47 = tpu.reciprocal %46 {approx = true} : vector<8x1xf32> -> vector<8x1xf32>
    %48 = vector.broadcast %47 : vector<8x1xf32> to vector<8x8xf32>
    %49 = arith.mulf %44, %48 : vector<8x8xf32>
    %50 = arith.truncf %49 : vector<8x8xf32> to vector<8x8xbf16>
    %51 = vector.extract_strided_slice %32 {offsets = [0, 0], sizes = [8, 8], strides = [1, 1]} : vector<8x32xf32> to vector<8x8xf32>
    %52 = arith.truncf %51 : vector<8x8xf32> to vector<8x8xbf16>
    %cst_26 = arith.constant dense<0.000000e+00> : vector<8x8xf32>
    %53 = tpu.matmul %50, %52, %cst_26 {dimension_numbers = #tpu.dot_dimension_numbers<[1], [0], [0], [1], [0, 0, 1, 1], [], []>} : vector<8x8xbf16>, vector<8x8xbf16>, vector<8x8xf32> -> vector<8x8xf32>
    %54 = vector.extract_strided_slice %25 {offsets = [0, 8], sizes = [8, 8], strides = [1, 1]} : vector<8x32xf32> to vector<8x8xf32>
    %cst_27 = arith.constant 0.353553385 : f32
    %55 = vector.broadcast %cst_27 : f32 to vector<8x8xf32>
    %56 = arith.mulf %54, %55 : vector<8x8xf32>
    %57 = arith.truncf %56 : vector<8x8xf32> to vector<8x8xbf16>
    %58 = vector.extract_strided_slice %28 {offsets = [0, 8], sizes = [8, 8], strides = [1, 1]} : vector<8x32xf32> to vector<8x8xf32>
    %59 = arith.truncf %58 : vector<8x8xf32> to vector<8x8xbf16>
    %cst_28 = arith.constant dense<0.000000e+00> : vector<8x8xf32>
    %60 = tpu.matmul %57, %59, %cst_28 {dimension_numbers = #tpu.dot_dimension_numbers<[1], [1], [0], [0], [0, 0, 1, 0], [], []>} : vector<8x8xbf16>, vector<8x8xbf16>, vector<8x8xf32> -> vector<8x8xf32>
    %cst_29 = arith.constant dense<0xFF800000> : vector<8xf32>
    %61 = vector.multi_reduction <maximumf>, %60, %cst_29 [1] : vector<8x8xf32> to vector<8xf32>
    %62 = vector.shape_cast %61 : vector<8xf32> to vector<8x1xf32>
    %63 = vector.broadcast %62 : vector<8x1xf32> to vector<8x8xf32>
    %64 = arith.subf %60, %63 : vector<8x8xf32>
    %65 = math.exp %64 : vector<8x8xf32>
    %cst_30 = arith.constant dense<0.000000e+00> : vector<8xf32>
    %66 = vector.multi_reduction <add>, %65, %cst_30 [1] : vector<8x8xf32> to vector<8xf32>
    %67 = vector.shape_cast %66 : vector<8xf32> to vector<8x1xf32>
    %68 = tpu.reciprocal %67 {approx = true} : vector<8x1xf32> -> vector<8x1xf32>
    %69 = vector.broadcast %68 : vector<8x1xf32> to vector<8x8xf32>
    %70 = arith.mulf %65, %69 : vector<8x8xf32>
    %71 = arith.truncf %70 : vector<8x8xf32> to vector<8x8xbf16>
    %72 = vector.extract_strided_slice %32 {offsets = [0, 8], sizes = [8, 8], strides = [1, 1]} : vector<8x32xf32> to vector<8x8xf32>
    %73 = arith.truncf %72 : vector<8x8xf32> to vector<8x8xbf16>
    %cst_31 = arith.constant dense<0.000000e+00> : vector<8x8xf32>
    %74 = tpu.matmul %71, %73, %cst_31 {dimension_numbers = #tpu.dot_dimension_numbers<[1], [0], [0], [1], [0, 0, 1, 1], [], []>} : vector<8x8xbf16>, vector<8x8xbf16>, vector<8x8xf32> -> vector<8x8xf32>
    %75 = vector.extract_strided_slice %25 {offsets = [0, 16], sizes = [8, 8], strides = [1, 1]} : vector<8x32xf32> to vector<8x8xf32>
    %cst_32 = arith.constant 0.353553385 : f32
    %76 = vector.broadcast %cst_32 : f32 to vector<8x8xf32>
    %77 = arith.mulf %75, %76 : vector<8x8xf32>
    %78 = arith.truncf %77 : vector<8x8xf32> to vector<8x8xbf16>
    %79 = vector.extract_strided_slice %28 {offsets = [0, 16], sizes = [8, 8], strides = [1, 1]} : vector<8x32xf32> to vector<8x8xf32>
    %80 = arith.truncf %79 : vector<8x8xf32> to vector<8x8xbf16>
    %cst_33 = arith.constant dense<0.000000e+00> : vector<8x8xf32>
    %81 = tpu.matmul %78, %80, %cst_33 {dimension_numbers = #tpu.dot_dimension_numbers<[1], [1], [0], [0], [0, 0, 1, 0], [], []>} : vector<8x8xbf16>, vector<8x8xbf16>, vector<8x8xf32> -> vector<8x8xf32>
    %cst_34 = arith.constant dense<0xFF800000> : vector<8xf32>
    %82 = vector.multi_reduction <maximumf>, %81, %cst_34 [1] : vector<8x8xf32> to vector<8xf32>
    %83 = vector.shape_cast %82 : vector<8xf32> to vector<8x1xf32>
    %84 = vector.broadcast %83 : vector<8x1xf32> to vector<8x8xf32>
    %85 = arith.subf %81, %84 : vector<8x8xf32>
    %86 = math.exp %85 : vector<8x8xf32>
    %cst_35 = arith.constant dense<0.000000e+00> : vector<8xf32>
    %87 = vector.multi_reduction <add>, %86, %cst_35 [1] : vector<8x8xf32> to vector<8xf32>
    %88 = vector.shape_cast %87 : vector<8xf32> to vector<8x1xf32>
    %89 = tpu.reciprocal %88 {approx = true} : vector<8x1xf32> -> vector<8x1xf32>
    %90 = vector.broadcast %89 : vector<8x1xf32> to vector<8x8xf32>
    %91 = arith.mulf %86, %90 : vector<8x8xf32>
    %92 = arith.truncf %91 : vector<8x8xf32> to vector<8x8xbf16>
    %93 = vector.extract_strided_slice %32 {offsets = [0, 16], sizes = [8, 8], strides = [1, 1]} : vector<8x32xf32> to vector<8x8xf32>
    %94 = arith.truncf %93 : vector<8x8xf32> to vector<8x8xbf16>
    %cst_36 = arith.constant dense<0.000000e+00> : vector<8x8xf32>
    %95 = tpu.matmul %92, %94, %cst_36 {dimension_numbers = #tpu.dot_dimension_numbers<[1], [0], [0], [1], [0, 0, 1, 1], [], []>} : vector<8x8xbf16>, vector<8x8xbf16>, vector<8x8xf32> -> vector<8x8xf32>
    %96 = vector.extract_strided_slice %25 {offsets = [0, 24], sizes = [8, 8], strides = [1, 1]} : vector<8x32xf32> to vector<8x8xf32>
    %cst_37 = arith.constant 0.353553385 : f32
    %97 = vector.broadcast %cst_37 : f32 to vector<8x8xf32>
    %98 = arith.mulf %96, %97 : vector<8x8xf32>
    %99 = arith.truncf %98 : vector<8x8xf32> to vector<8x8xbf16>
    %100 = vector.extract_strided_slice %28 {offsets = [0, 24], sizes = [8, 8], strides = [1, 1]} : vector<8x32xf32> to vector<8x8xf32>
    %101 = arith.truncf %100 : vector<8x8xf32> to vector<8x8xbf16>
    %cst_38 = arith.constant dense<0.000000e+00> : vector<8x8xf32>
    %102 = tpu.matmul %99, %101, %cst_38 {dimension_numbers = #tpu.dot_dimension_numbers<[1], [1], [0], [0], [0, 0, 1, 0], [], []>} : vector<8x8xbf16>, vector<8x8xbf16>, vector<8x8xf32> -> vector<8x8xf32>
    %cst_39 = arith.constant dense<0xFF800000> : vector<8xf32>
    %103 = vector.multi_reduction <maximumf>, %102, %cst_39 [1] : vector<8x8xf32> to vector<8xf32>
    %104 = vector.shape_cast %103 : vector<8xf32> to vector<8x1xf32>
    %105 = vector.broadcast %104 : vector<8x1xf32> to vector<8x8xf32>
    %106 = arith.subf %102, %105 : vector<8x8xf32>
    %107 = math.exp %106 : vector<8x8xf32>
    %cst_40 = arith.constant dense<0.000000e+00> : vector<8xf32>
    %108 = vector.multi_reduction <add>, %107, %cst_40 [1] : vector<8x8xf32> to vector<8xf32>
    %109 = vector.shape_cast %108 : vector<8xf32> to vector<8x1xf32>
    %110 = tpu.reciprocal %109 {approx = true} : vector<8x1xf32> -> vector<8x1xf32>
    %111 = vector.broadcast %110 : vector<8x1xf32> to vector<8x8xf32>
    %112 = arith.mulf %107, %111 : vector<8x8xf32>
    %113 = arith.truncf %112 : vector<8x8xf32> to vector<8x8xbf16>
    %114 = vector.extract_strided_slice %32 {offsets = [0, 24], sizes = [8, 8], strides = [1, 1]} : vector<8x32xf32> to vector<8x8xf32>
    %115 = arith.truncf %114 : vector<8x8xf32> to vector<8x8xbf16>
    %cst_41 = arith.constant dense<0.000000e+00> : vector<8x8xf32>
    %116 = tpu.matmul %113, %115, %cst_41 {dimension_numbers = #tpu.dot_dimension_numbers<[1], [0], [0], [1], [0, 0, 1, 1], [], []>} : vector<8x8xbf16>, vector<8x8xbf16>, vector<8x8xf32> -> vector<8x8xf32>
    %117 = tpu.concatenate %53, %74, %95, %116 in 1 : vector<8x8xf32>, vector<8x8xf32>, vector<8x8xf32>, vector<8x8xf32> -> vector<8x32xf32>
    %118 = arith.truncf %117 : vector<8x32xf32> to vector<8x32xbf16>
    %cst_42 = arith.constant dense<0.000000e+00> : vector<8x32xf32>
    %119 = tpu.matmul %118, %7, %cst_42 {dimension_numbers = #tpu.dot_dimension_numbers<[1], [0], [0], [1], [0, 0, 1, 1], [], []>} : vector<8x32xbf16>, vector<32x32xbf16>, vector<8x32xf32> -> vector<8x32xf32>
    %120 = vector.broadcast %13 : vector<1x32xf32> to vector<8x32xf32>
    %121 = arith.addf %119, %120 : vector<8x32xf32>
    %122 = arith.addf %1, %121 : vector<8x32xf32>
    %cst_43 = arith.constant dense<0.000000e+00> : vector<8xf32>
    %123 = vector.multi_reduction <add>, %122, %cst_43 [1] : vector<8x32xf32> to vector<8xf32>
    %124 = vector.shape_cast %123 : vector<8xf32> to vector<8x1xf32>
    %cst_44 = arith.constant 3.200000e+01 : f32
    %125 = vector.broadcast %cst_44 : f32 to vector<8x1xf32>
    %126 = arith.divf %124, %125 : vector<8x1xf32>
    %127 = vector.broadcast %126 : vector<8x1xf32> to vector<8x32xf32>
    %128 = arith.subf %122, %127 : vector<8x32xf32>
    %129 = arith.mulf %128, %128 : vector<8x32xf32>
    %cst_45 = arith.constant dense<0.000000e+00> : vector<8xf32>
    %130 = vector.multi_reduction <add>, %129, %cst_45 [1] : vector<8x32xf32> to vector<8xf32>
    %131 = vector.shape_cast %130 : vector<8xf32> to vector<8x1xf32>
    %cst_46 = arith.constant 3.200000e+01 : f32
    %132 = vector.broadcast %cst_46 : f32 to vector<8x1xf32>
    %133 = arith.divf %131, %132 : vector<8x1xf32>
    %134 = vector.broadcast %126 : vector<8x1xf32> to vector<8x32xf32>
    %135 = arith.subf %122, %134 : vector<8x32xf32>
    %cst_47 = arith.constant 9.99999974E-6 : f32
    %136 = vector.broadcast %cst_47 : f32 to vector<8x1xf32>
    %137 = arith.addf %133, %136 : vector<8x1xf32>
    %138 = math.rsqrt %137 : vector<8x1xf32>
    %139 = vector.broadcast %138 : vector<8x1xf32> to vector<8x32xf32>
    %140 = arith.mulf %135, %139 : vector<8x32xf32>
    %141 = vector.broadcast %14 : vector<1x32xf32> to vector<8x32xf32>
    %142 = arith.mulf %140, %141 : vector<8x32xf32>
    %143 = vector.broadcast %15 : vector<1x32xf32> to vector<8x32xf32>
    %144 = arith.addf %142, %143 : vector<8x32xf32>
    %145 = arith.truncf %144 : vector<8x32xf32> to vector<8x32xbf16>
    %cst_48 = arith.constant dense<0.000000e+00> : vector<8x64xf32>
    %146 = tpu.matmul %145, %8, %cst_48 {dimension_numbers = #tpu.dot_dimension_numbers<[1], [0], [0], [1], [0, 0, 1, 1], [], []>} : vector<8x32xbf16>, vector<32x64xbf16>, vector<8x64xf32> -> vector<8x64xf32>
    %147 = vector.broadcast %16 : vector<1x64xf32> to vector<8x64xf32>
    %148 = arith.addf %146, %147 : vector<8x64xf32>
    %cst_49 = arith.constant 0.000000e+00 : f32
    %149 = vector.broadcast %cst_49 : f32 to vector<8x64xf32>
    %150 = arith.maximumf %148, %149 : vector<8x64xf32>
    %151 = arith.truncf %150 : vector<8x64xf32> to vector<8x64xbf16>
    %cst_50 = arith.constant dense<0.000000e+00> : vector<8x32xf32>
    %152 = tpu.matmul %151, %9, %cst_50 {dimension_numbers = #tpu.dot_dimension_numbers<[1], [0], [0], [1], [0, 0, 1, 1], [], []>} : vector<8x64xbf16>, vector<64x32xbf16>, vector<8x32xf32> -> vector<8x32xf32>
    %153 = vector.broadcast %17 : vector<1x32xf32> to vector<8x32xf32>
    %154 = arith.addf %152, %153 : vector<8x32xf32>
    %155 = arith.addf %144, %154 : vector<8x32xf32>
    %cst_51 = arith.constant dense<0.000000e+00> : vector<8xf32>
    %156 = vector.multi_reduction <add>, %155, %cst_51 [1] : vector<8x32xf32> to vector<8xf32>
    %157 = vector.shape_cast %156 : vector<8xf32> to vector<8x1xf32>
    %cst_52 = arith.constant 3.200000e+01 : f32
    %158 = vector.broadcast %cst_52 : f32 to vector<8x1xf32>
    %159 = arith.divf %157, %158 : vector<8x1xf32>
    %160 = vector.broadcast %159 : vector<8x1xf32> to vector<8x32xf32>
    %161 = arith.subf %155, %160 : vector<8x32xf32>
    %162 = arith.mulf %161, %161 : vector<8x32xf32>
    %cst_53 = arith.constant dense<0.000000e+00> : vector<8xf32>
    %163 = vector.multi_reduction <add>, %162, %cst_53 [1] : vector<8x32xf32> to vector<8xf32>
    %164 = vector.shape_cast %163 : vector<8xf32> to vector<8x1xf32>
    %cst_54 = arith.constant 3.200000e+01 : f32
    %165 = vector.broadcast %cst_54 : f32 to vector<8x1xf32>
    %166 = arith.divf %164, %165 : vector<8x1xf32>
    %167 = vector.broadcast %159 : vector<8x1xf32> to vector<8x32xf32>
    %168 = arith.subf %155, %167 : vector<8x32xf32>
    %cst_55 = arith.constant 9.99999974E-6 : f32
    %169 = vector.broadcast %cst_55 : f32 to vector<8x1xf32>
    %170 = arith.addf %166, %169 : vector<8x1xf32>
    %171 = math.rsqrt %170 : vector<8x1xf32>
    %172 = vector.broadcast %171 : vector<8x1xf32> to vector<8x32xf32>
    %173 = arith.mulf %168, %172 : vector<8x32xf32>
    %174 = vector.broadcast %18 : vector<1x32xf32> to vector<8x32xf32>
    %175 = arith.mulf %173, %174 : vector<8x32xf32>
    %176 = vector.broadcast %19 : vector<1x32xf32> to vector<8x32xf32>
    %177 = arith.addf %175, %176 : vector<8x32xf32>
    %c0_56 = arith.constant 0 : index
    %c0_57 = arith.constant 0 : index
    %c0_58 = arith.constant 0 : index
    %178 = vector.load %arg6[%c0_56, %c0_57, %c0_58] : memref<1x8x32xf32, #tpu.memory_space<vmem>>, vector<1x8x32xf32>
    %179 = vector.shape_cast %178 : vector<1x8x32xf32> to vector<8x32xf32>
    %180 = vector.shape_cast %177 : vector<8x32xf32> to vector<1x8x32xf32>
    tpu.vector_store %arg6[%c0_56, %c0_57, %c0_58], %180 {strides = array<i32>} : memref<1x8x32xf32, #tpu.memory_space<vmem>>, vector<1x8x32xf32>,
    return
  }
  func.func @transform_0(%arg0: i32) -> (i32, i32, i32) {
    %c0_i32 = arith.constant 0 : i32
    %c0_i32_0 = arith.constant 0 : i32
    %c0_i32_1 = arith.constant 0 : i32
    return %arg0, %c0_i32, %c0_i32_0 : i32, i32, i32
  }
  func.func @transform_1(%arg0: i32) -> (i32, i32, i32) {
    %c0_i32 = arith.constant 0 : i32
    %c0_i32_0 = arith.constant 0 : i32
    %c0_i32_1 = arith.constant 0 : i32
    return %arg0, %c0_i32, %c0_i32_0 : i32, i32, i32
  }
  func.func @transform_2(%arg0: i32) -> (i32, i32) {
    %c0_i32 = arith.constant 0 : i32
    %c0_i32_0 = arith.constant 0 : i32
    %c0_i32_1 = arith.constant 0 : i32
    return %c0_i32, %c0_i32_0 : i32, i32
  }
  func.func @transform_3(%arg0: i32) -> (i32, i32) {
    %c0_i32 = arith.constant 0 : i32
    %c0_i32_0 = arith.constant 0 : i32
    %c0_i32_1 = arith.constant 0 : i32
    return %c0_i32, %c0_i32_0 : i32, i32
  }
  func.func @transform_4(%arg0: i32) -> (i32, i32) {
    %c0_i32 = arith.constant 0 : i32
    %c0_i32_0 = arith.constant 0 : i32
    %c0_i32_1 = arith.constant 0 : i32
    return %c0_i32, %c0_i32_0 : i32, i32
  }
  func.func @transform_5(%arg0: i32) -> (i32, i32, i32) {
    %c0_i32 = arith.constant 0 : i32
    %c0_i32_0 = arith.constant 0 : i32
    %c0_i32_1 = arith.constant 0 : i32
    return %arg0, %c0_i32, %c0_i32_0 : i32, i32, i32
  }
}

</mosaic_0001>

<llo_original>
// kernel: act_encoder_layer.1
$region0: #{act_encoder_layer.1}
  #allocation0 [shape = 'u32[]', space=smem, size = 0x4, offset = 0x4, fixed_abs, tag = 'smem constant byte address 0x4 - core index']
  #allocation1 [shape = 'u32[144,128]{1,0:T(1,128)}', space=vmem, size = 0x12000, scoped, tag = 'internal scratch']
  %s0 = inlined_call_operand.vmem [shape: f32[2,8,32], index: 0, kind: input, shape index: {}]
  %s1 = inlined_call_operand.vmem [shape: f32[2,8,32], index: 1, kind: input, shape index: {}]
  %s2 = inlined_call_operand.vmem [shape: bf16[32,128], index: 2, kind: input, shape index: {}]
  %s3 = inlined_call_operand.vmem [shape: bf16[96,64], index: 3, kind: input, shape index: {}]
  %s4 = inlined_call_operand.vmem [shape: f32[10,64], index: 4, kind: input, shape index: {}]
  %s5 = inlined_call_operand.vmem [shape: f32[2,8,32], index: 5, kind: output, shape index: {}]
  %s6 = sld [smem:[#allocation0]]
  $region53: #{act_encoder_layer.1} parent=0
    _
  %s8 = ssub.s32 1, %s6
  %s9 = scalar_select 0, %s8, %s6
  loop: start=0, step=1, limit=4
  $region2: #{act_encoder_layer.1} parent=0 // loop_pre_header
    _
  $region3: #{act_encoder_layer.1} parent=0 // loop_header
    %s11 = sphi 0, %s15
    %p12 = scmp.ge.s32.totalorder %s11, 4
    %s21 = sphi 0, %s23
    %s24 = sphi 0, %s21
    %s25 = sphi 0, %s24
    %s41 = sphi 0, %s25
    %s47 = sphi 0, %s49
    %s50 = sphi 0, %s47
    %s51 = sphi 0, %s50
    %s67 = sphi 0, %s51
    %s71 = sphi 0, %s71
    %s73 = sphi 0, %s71
    %s74 = sphi 0, %s73
    %s88 = sphi 0, %s74
    %s92 = sphi 0, %s92
    %s94 = sphi 0, %s92
    %s95 = sphi 0, %s94
    %s109 = sphi 0, %s95
    %s113 = sphi 0, %s113
    %s115 = sphi 0, %s113
    %s116 = sphi 0, %s115
    %s130 = sphi 0, %s116
    %s136 = sphi 0, %s138
    %s139 = sphi 0, %s136
    %s140 = sphi 0, %s139
    %s156 = sphi 0, %s140
  $region4: #{act_encoder_layer.1} parent=0 // loop_header_branch
    %14 = sbr.rel (%p12) target = $region8
  $region5: #{act_encoder_layer.1} parent=0 // loop_body
    %s16 = ssub.s32 %s11, 1
    %s17 = ssub.s32 %s11, 2
    %s18 = sadd.s32 %s11, 1
    %s19 = ssub.s32 %s11, %s18
    %p20 = scmp.eq.s32.totalorder %s19, 0
    %s22 = sadd.s32 %s21, 1
    %s23 = scalar_select %p20, %s21, %s22
    %p26 = pneg %p20
    %p27 = scmp.eq.s32.totalorder %s11, 1
    %p28 = por %p26, %p27
    %p29 = scmp.ne.s32.totalorder %s21, %s24
    %p30 = scmp.eq.s32.totalorder %s11, 0
    %p31 = por %p29, %p30
    %p32 = scmp.ne.s32.totalorder %s21, %s24
    %p33 = scmp.eq.s32.totalorder %s16, 1
    %p34 = por %p32, %p33
    %p35 = scmp.ne.s32.totalorder %s24, %s25
    %p36 = scmp.eq.s32.totalorder %s16, 0
    %p37 = por %p35, %p36
    %p38 = scmp.ne.s32.totalorder %s24, %s25
    %p39 = scmp.eq.s32.totalorder %s17, 1
    %p40 = por %p38, %p39
    %p42 = scmp.ne.s32.totalorder %s25, %s41
    %p43 = scmp.eq.s32.totalorder %s17, 0
    %p44 = por %p42, %p43
    %s45 = ssub.s32 %s11, %s18
    %p46 = scmp.eq.s32.totalorder %s45, 0
    %s48 = sadd.s32 %s47, 1
    %s49 = scalar_select %p46, %s47, %s48
    %p52 = pneg %p46
    %p53 = scmp.eq.s32.totalorder %s11, 1
    %p54 = por %p52, %p53
    %p55 = scmp.ne.s32.totalorder %s47, %s50
    %p56 = scmp.eq.s32.totalorder %s11, 0
    %p57 = por %p55, %p56
    %p58 = scmp.ne.s32.totalorder %s47, %s50
    %p59 = scmp.eq.s32.totalorder %s16, 1
    %p60 = por %p58, %p59
    %p61 = scmp.ne.s32.totalorder %s50, %s51
    %p62 = scmp.eq.s32.totalorder %s16, 0
    %p63 = por %p61, %p62
    %p64 = scmp.ne.s32.totalorder %s50, %s51
    %p65 = scmp.eq.s32.totalorder %s17, 1
    %p66 = por %p64, %p65
    %p68 = scmp.ne.s32.totalorder %s51, %s67
    %p69 = scmp.eq.s32.totalorder %s17, 0
    %p70 = por %p68, %p69
    %s72 = sadd.s32 %s71, 1
    %p75 = scmp.eq.s32.totalorder %s11, 1
    %p76 = scmp.ne.s32.totalorder %s71, %s73
    %p77 = scmp.eq.s32.totalorder %s11, 0
    %p78 = por %p76, %p77
    %p79 = scmp.ne.s32.totalorder %s71, %s73
    %p80 = scmp.eq.s32.totalorder %s16, 1
    %p81 = por %p79, %p80
    %p82 = scmp.ne.s32.totalorder %s73, %s74
    %p83 = scmp.eq.s32.totalorder %s16, 0
    %p84 = por %p82, %p83
    %p85 = scmp.ne.s32.totalorder %s73, %s74
    %p86 = scmp.eq.s32.totalorder %s17, 1
    %p87 = por %p85, %p86
    %p89 = scmp.ne.s32.totalorder %s74, %s88
    %p90 = scmp.eq.s32.totalorder %s17, 0
    %p91 = por %p89, %p90
    %s93 = sadd.s32 %s92, 1
    %p96 = scmp.eq.s32.totalorder %s11, 1
    %p97 = scmp.ne.s32.totalorder %s92, %s94
    %p98 = scmp.eq.s32.totalorder %s11, 0
    %p99 = por %p97, %p98
    %p100 = scmp.ne.s32.totalorder %s92, %s94
    %p101 = scmp.eq.s32.totalorder %s16, 1
    %p102 = por %p100, %p101
    %p103 = scmp.ne.s32.totalorder %s94, %s95
    %p104 = scmp.eq.s32.totalorder %s16, 0
    %p105 = por %p103, %p104
    %p106 = scmp.ne.s32.totalorder %s94, %s95
    %p107 = scmp.eq.s32.totalorder %s17, 1
    %p108 = por %p106, %p107
    %p110 = scmp.ne.s32.totalorder %s95, %s109
    %p111 = scmp.eq.s32.totalorder %s17, 0
    %p112 = por %p110, %p111
    %s114 = sadd.s32 %s113, 1
    %p117 = scmp.eq.s32.totalorder %s11, 1
    %p118 = scmp.ne.s32.totalorder %s113, %s115
    %p119 = scmp.eq.s32.totalorder %s11, 0
    %p120 = por %p118, %p119
    %p121 = scmp.ne.s32.totalorder %s113, %s115
    %p122 = scmp.eq.s32.totalorder %s16, 1
    %p123 = por %p121, %p122
    %p124 = scmp.ne.s32.totalorder %s115, %s116
    %p125 = scmp.eq.s32.totalorder %s16, 0
    %p126 = por %p124, %p125
    %p127 = scmp.ne.s32.totalorder %s115, %s116
    %p128 = scmp.eq.s32.totalorder %s17, 1
    %p129 = por %p127, %p128
    %p131 = scmp.ne.s32.totalorder %s116, %s130
    %p132 = scmp.eq.s32.totalorder %s17, 0
    %p133 = por %p131, %p132
    %s134 = ssub.s32 %s11, %s18
    %p135 = scmp.eq.s32.totalorder %s134, 0
    %s137 = sadd.s32 %s136, 1
    %s138 = scalar_select %p135, %s136, %s137
    %p141 = pneg %p135
    %p142 = scmp.eq.s32.totalorder %s11, 1
    %p143 = por %p141, %p142
    %p144 = scmp.ne.s32.totalorder %s136, %s139
    %p145 = scmp.eq.s32.totalorder %s11, 0
    %p146 = por %p144, %p145
    %p147 = scmp.ne.s32.totalorder %s136, %s139
    %p148 = scmp.eq.s32.totalorder %s16, 1
    %p149 = por %p147, %p148
    %p150 = scmp.ne.s32.totalorder %s139, %s140
    %p151 = scmp.eq.s32.totalorder %s16, 0
    %p152 = por %p150, %p151
    %p153 = scmp.ne.s32.totalorder %s139, %s140
    %p154 = scmp.eq.s32.totalorder %s17, 1
    %p155 = por %p153, %p154
    %p157 = scmp.ne.s32.totalorder %s140, %s156
    %p158 = scmp.eq.s32.totalorder %s17, 0
    %p159 = por %p157, %p158
    %p160 = scmp.le.s32.totalorder 1, %s11
    %p161 = scmp.lt.s32.totalorder %s11, 3
    %p162 = pnand %p160, %p161
    %p163 = pneg %p162
    // Predicated region
    $region9: #{act_encoder_layer.1} parent=5 // pred_check
      _
    $region10: #{act_encoder_layer.1} parent=5 // pred_check_branch
      %165 = sbr.rel (%p162) target = $region12
    $region11: #{act_encoder_layer.1} parent=5 // pred_region
      %s166 = ssub.s32 %s11, 1
      // Predicated region
      $region13: #{act_encoder_layer.1} parent=11 // pred_check
        %p167 = pneg %p84
      $region14: #{act_encoder_layer.1} parent=11 // pred_check_branch
        %169 = sbr.rel (%p167) target = $region16
      $region15: #{act_encoder_layer.1} parent=11 // pred_region
        _
      $region16: #{act_encoder_layer.1} parent=11 // pred_fallthru
        _
      // Predicated region
      $region17: #{act_encoder_layer.1} parent=11 // pred_check
        %p170 = pneg %p105
      $region18: #{act_encoder_layer.1} parent=11 // pred_check_branch
        %172 = sbr.rel (%p170) target = $region20
      $region19: #{act_encoder_layer.1} parent=11 // pred_region
        _
      $region20: #{act_encoder_layer.1} parent=11 // pred_fallthru
        _
      // Predicated region
      $region21: #{act_encoder_layer.1} parent=11 // pred_check
        %p173 = pneg %p126
      $region22: #{act_encoder_layer.1} parent=11 // pred_check_branch
        %175 = sbr.rel (%p173) target = $region24
      $region23: #{act_encoder_layer.1} parent=11 // pred_region
        _
      $region24: #{act_encoder_layer.1} parent=11 // pred_fallthru
        _
    $region12: #{act_encoder_layer.1} parent=5 // pred_fallthru
      _
    %p176 = scmp.lt.s32.totalorder %s11, 2
    // Predicated region
    $region25: #{act_encoder_layer.1} parent=5 // pred_check
      %p177 = pneg %p176
    $region26: #{act_encoder_layer.1} parent=5 // pred_check_branch
      %179 = sbr.rel (%p177) target = $region28
    $region27: #{act_encoder_layer.1} parent=5 // pred_region
      // Predicated region
      $region29: #{act_encoder_layer.1} parent=27 // pred_check
        %p180 = pneg %p31
      $region30: #{act_encoder_layer.1} parent=27 // pred_check_branch
        %182 = sbr.rel (%p180) target = $region32
      $region31: #{act_encoder_layer.1} parent=27 // pred_region
        %p183 = scmp.lt.s32.totalorder %s11, 1
        %s184 = scalar_select %p183, %s11, 1
        %s185 = smul.addr %s184, 8
        %s186 = scalar_lea.vmem %s0, %s185
      $region32: #{act_encoder_layer.1} parent=27 // pred_fallthru
        _
      // Predicated region
      $region33: #{act_encoder_layer.1} parent=27 // pred_check
        %p187 = pneg %p57
      $region34: #{act_encoder_layer.1} parent=27 // pred_check_branch
        %189 = sbr.rel (%p187) target = $region36
      $region35: #{act_encoder_layer.1} parent=27 // pred_region
        %p190 = scmp.lt.s32.totalorder %s11, 1
        %s191 = scalar_select %p190, %s11, 1
        %s192 = smul.addr %s191, 8
        %s193 = scalar_lea.vmem %s1, %s192
      $region36: #{act_encoder_layer.1} parent=27 // pred_fallthru
        _
    $region28: #{act_encoder_layer.1} parent=5 // pred_fallthru
      _
    %p194 = scmp.le.s32.totalorder 1, %s11
    %p195 = scmp.lt.s32.totalorder %s11, 3
    %p196 = pnand %p194, %p195
    %p197 = pneg %p196
    // Predicated region
    $region37: #{act_encoder_layer.1} parent=5 // pred_check
      _
    $region38: #{act_encoder_layer.1} parent=5 // pred_check_branch
      %199 = sbr.rel (%p196) target = $region40
    $region39: #{act_encoder_layer.1} parent=5 // pred_region
      %s200 = ssub.s32 %s11, 1
      %p201 = scmp.lt.s32.totalorder %s16, 1
      %s202 = scalar_select %p201, %s16, 1
      %s203 = smul.addr %s202, 8
      %s204 = scalar_lea.vmem %s0, %s203
      %p205 = pneg %p37
      %p206 = pneg %p34
      %p207 = scmp.lt.s32.totalorder %s16, 1
      %s208 = scalar_select %p207, %s16, 1
      %s209 = smul.addr %s208, 8
      %s210 = scalar_lea.vmem %s1, %s209
      %p211 = pneg %p63
      %p212 = pneg %p60
      %p213 = pneg %p84
      %p214 = pneg %p81
      %p215 = pneg %p105
      %p216 = pneg %p102
      %p217 = pneg %p126
      %p218 = pneg %p123
      %p219 = pneg %p152
      %p220 = pneg %p149
      %p221 = scmp.lt.s32.totalorder %s16, 1
      %s222 = scalar_select %p221, %s16, 1
      %s223 = smul.addr %s222, 8
      %s224 = scalar_lea.vmem %s5, %s223
      %p225 = scmp.lt.s32.totalorder %s16, 1
      %s226 = scalar_select %p225, %s16, 1
      %s227 = smul.addr %s226, 8
      %s228 = scalar_lea.vmem %s0, %s227
      %p229 = scmp.lt.s32.totalorder %s16, 1
      %s230 = scalar_select %p229, %s16, 1
      %s231 = smul.addr %s230, 8
      %s232 = scalar_lea.vmem %s1, %s231
      %p233 = scmp.lt.s32.totalorder %s16, 1
      %s234 = scalar_select %p233, %s16, 1
      %s235 = smul.addr %s234, 8
      %s236 = scalar_lea.vmem %s5, %s235
      %v238 = vld [vmem:[%s228] sm:$0xff]
      %v239 = vld [vmem:[%s232] sm:$0xff]
      %v240 = vld [vmem:[%s2] sm:$0xf]
      %v241 = vld [vmem:[%s2 + $0x4] sm:$0xf]
      %v242 = vld [vmem:[%s2 + $0x8] sm:$0xf]
      %v243 = vld [vmem:[%s2 + $0xc] sm:$0xf]
      %v244 = vld [vmem:[%s3] sm:$0xf]
      %v245 = vld [vmem:[%s3 + $0x4] sm:$0xf]
      %v246 = vld [vmem:[%s3 + $0x8] sm:$0xf]
      %v247 = vld [vmem:[%s3 + $0xc] sm:$0xf]
      %v248 = vld [vmem:[%s3 + $0x10] sm:$0xf]
      %v249 = vld [vmem:[%s3 + $0x14] sm:$0xf]
      %v250 = vld [vmem:[%s3 + $0x18] sm:$0xf]
      %v251 = vld [vmem:[%s3 + $0x1c] sm:$0xf]
      %v252 = vld [vmem:[%s3 + $0x20] sm:$0xf]
      %v253 = vld [vmem:[%s3 + $0x24] sm:$0xf]
      %v254 = vld [vmem:[%s3 + $0x28] sm:$0xf]
      %v255 = vld [vmem:[%s3 + $0x2c] sm:$0xf]
      %v256 = vld [vmem:[%s4] sm:$0x1]
      %v257 = vld [vmem:[%s4 + $0x1] sm:$0x1]
      %v258 = vld [vmem:[%s4 + $0x2] sm:$0x1]
      %v259 = vld [vmem:[%s4 + $0x3] sm:$0x1]
      %v260 = vld [vmem:[%s4 + $0x4] sm:$0x1]
      %v261 = vld [vmem:[%s4 + $0x5] sm:$0x1]
      %v262 = vld [vmem:[%s4 + $0x6] sm:$0x1]
      %v263 = vld [vmem:[%s4 + $0x7] sm:$0x1]
      %v264 = vld [vmem:[%s4 + $0x8] sm:$0x1]
      %v265 = vld [vmem:[%s4 + $0x9] sm:$0x1]
      %v266 = vadd.f32 %v238, %v239
      %v267 = vpack.c.bf16 %v266, %v266
      %v272 = vunpack.c.l.b16 %v240
      %v273 = vunpack.c.l.b16 %v241
      %v274 = vunpack.c.l.b16 %v242
      %v275 = vunpack.c.l.b16 %v243
      %v276 = vpack.c.b16 %v273, %v272
      %v277 = vpack.c.b16 %v275, %v274
      %vm280 = vcmask 261120
      %v282 = vsel %vm280, %v267, 0
      %284 = vmatprep.subr.bf16.mxu0 0
      %285 = vmatpush1.bf16.msra.mxu0 %v276
      %286 = vmatprep.subr.bf16.mxu0 0
      %287 = vmatpush1.bf16.msra.mxu0 %v277
      %288 = vmatprep.subr.bf16.mxu0 0
      %289 = vmatpush1.bf16.msra.mxu0 0
      %290 = vmatprep.subr.bf16.mxu0 0
      %291 = vmatpush1.bf16.msra.mxu0 0
      %292 = vmatprep.subr.bf16.mxu0 0
      %293 = vmatpush1.bf16.msra.mxu0 0
      %294 = vmatprep.subr.bf16.mxu0 0
      %295 = vmatpush1.bf16.msra.mxu0 0
      %296 = vmatprep.subr.bf16.mxu0 0
      %297 = vmatpush1.bf16.msra.mxu0 0
      %298 = vmatprep.subr.bf16.mxu0 0
      %299 = vmatpush1.bf16.msra.mxu0 0
      %300 = vmatprep.subr.bf16.mxu0 0
      %301 = vmatpush1.bf16.msra.mxu0 0
      %302 = vmatprep.subr.bf16.mxu0 0
      %303 = vmatpush1.bf16.msra.mxu0 0
      %304 = vmatprep.subr.bf16.mxu0 0
      %305 = vmatpush1.bf16.msra.mxu0 0
      %306 = vmatprep.subr.bf16.mxu0 0
      %307 = vmatpush1.bf16.msra.mxu0 0
      %308 = vmatprep.subr.bf16.mxu0 0
      %309 = vmatpush1.bf16.msra.mxu0 0
      %310 = vmatprep.subr.bf16.mxu0 0
      %311 = vmatpush1.bf16.msra.mxu0 0
      %312 = vmatprep.subr.bf16.mxu0 0
      %313 = vmatpush1.bf16.msra.mxu0 0
      %314 = vmatprep.subr.bf16.mxu0 0
      %315 = vmatpush1.bf16.msra.mxu0 0
      %316 = vmatprep.mubr.bf16.mxu0 0
      %317 = vmatmul.mubr.bf16.gmra.mrb[0].mxu0 %v282
      %v318 = vpop.f32.mrb[0].mxu0
      %v319 = vadd.f32 0.0, %v318
      %v320 = vpop.f32.mrb[0].mxu0
      %v321 = vpop.f32.mrb[0].mxu0
      %v322 = vpop.f32.mrb[0].mxu0
      %323 = vdwg.mxu0
      %v324 = vlaneseq
      %v325 = vshrl.u32 %v324, 7
      %v326 = vsub.s32 0, %v325
      %v327 = vrot.slane %v256, %v326
      %v328 = vadd.f32 %v319, %v327
      %v329 = vlaneseq
      %v330 = vshrl.u32 %v329, 7
      %v331 = vsub.s32 0, %v330
      %v332 = vrot.slane %v257, %v331
      %334 = vrot.lane.b32.xlu0 %v332, 32
      %v335 = vpop.permute.xlu0 %334
      %v337 = vadd.f32 %v319, %v335
      %v338 = vpack.c.bf16 %v238, %v238
      %v339 = vlaneseq
      %v340 = vshrl.u32 %v339, 7
      %v341 = vsub.s32 0, %v340
      %v342 = vrot.slane %v258, %v341
      %343 = vrot.lane.b32.xlu0 %v276, 64
      %v344 = vpop.permute.xlu0 %343
      %345 = vrot.lane.b32.xlu0 %v277, 64
      %v346 = vpop.permute.xlu0 %345
      %v350 = vsel %vm280, %v338, 0
      %352 = vmatprep.subr.bf16.mxu0 0
      %353 = vmatpush1.bf16.msra.mxu0 %v344
      %354 = vmatprep.subr.bf16.mxu0 0
      %355 = vmatpush1.bf16.msra.mxu0 %v346
      %356 = vmatprep.subr.bf16.mxu0 0
      %357 = vmatpush1.bf16.msra.mxu0 0
      %358 = vmatprep.subr.bf16.mxu0 0
      %359 = vmatpush1.bf16.msra.mxu0 0
      %360 = vmatprep.subr.bf16.mxu0 0
      %361 = vmatpush1.bf16.msra.mxu0 0
      %362 = vmatprep.subr.bf16.mxu0 0
      %363 = vmatpush1.bf16.msra.mxu0 0
      %364 = vmatprep.subr.bf16.mxu0 0
      %365 = vmatpush1.bf16.msra.mxu0 0
      %366 = vmatprep.subr.bf16.mxu0 0
      %367 = vmatpush1.bf16.msra.mxu0 0
      %368 = vmatprep.subr.bf16.mxu0 0
      %369 = vmatpush1.bf16.msra.mxu0 0
      %370 = vmatprep.subr.bf16.mxu0 0
      %371 = vmatpush1.bf16.msra.mxu0 0
      %372 = vmatprep.subr.bf16.mxu0 0
      %373 = vmatpush1.bf16.msra.mxu0 0
      %374 = vmatprep.subr.bf16.mxu0 0
      %375 = vmatpush1.bf16.msra.mxu0 0
      %376 = vmatprep.subr.bf16.mxu0 0
      %377 = vmatpush1.bf16.msra.mxu0 0
      %378 = vmatprep.subr.bf16.mxu0 0
      %379 = vmatpush1.bf16.msra.mxu0 0
      %380 = vmatprep.subr.bf16.mxu0 0
      %381 = vmatpush1.bf16.msra.mxu0 0
      %382 = vmatprep.subr.bf16.mxu0 0
      %383 = vmatpush1.bf16.msra.mxu0 0
      %384 = vmatprep.mubr.bf16.mxu0 0
      %385 = vmatmul.mubr.bf16.gmra.mrb[0].mxu0 %v350
      %v386 = vpop.f32.mrb[0].mxu0
      %v387 = vadd.f32 %v342, %v386
      %v388 = vpop.f32.mrb[0].mxu0
      %v389 = vpop.f32.mrb[0].mxu0
      %v390 = vpop.f32.mrb[0].mxu0
      %391 = vdwg.mxu0
      %v392 = vmul.f32 %v328, 0.35355338
      %v393 = vpack.c.bf16 %v392, %v392
      %v394 = vpack.c.bf16 %v337, %v337
      %396 = vrot.lane.b32.xlu0 %v394, 96
      %v397 = vpop.permute.xlu0 %396
      %vm398 = vcmask 64512
      %v400 = vsel %vm398, %v393, 0
      %v403 = vsel %vm398, %v397, 0
      %405 = vmatprep.subr.bf16.mxu0 0
      %406 = vmatpush1.bf16.xpose.msra.mxu0 %v403
      %407 = vmatprep.subr.bf16.mxu0 0
      %408 = vmatpush1.bf16.xpose.msra.mxu0 0
      %409 = vmatprep.subr.bf16.mxu0 0
      %410 = vmatpush1.bf16.xpose.msra.mxu0 0
      %411 = vmatprep.subr.bf16.mxu0 0
      %412 = vmatpush1.bf16.xpose.msra.mxu0 0
      %413 = vmatprep.subr.bf16.mxu0 0
      %414 = vmatpush1.bf16.xpose.msra.mxu0 0
      %415 = vmatprep.subr.bf16.mxu0 0
      %416 = vmatpush1.bf16.xpose.msra.mxu0 0
      %417 = vmatprep.subr.bf16.mxu0 0
      %418 = vmatpush1.bf16.xpose.msra.mxu0 0
      %419 = vmatprep.subr.bf16.mxu0 0
      %420 = vmatpush1.bf16.xpose.msra.mxu0 0
      %421 = vmatprep.subr.bf16.mxu0 0
      %422 = vmatpush1.bf16.xpose.msra.mxu0 0
      %423 = vmatprep.subr.bf16.mxu0 0
      %424 = vmatpush1.bf16.xpose.msra.mxu0 0
      %425 = vmatprep.subr.bf16.mxu0 0
      %426 = vmatpush1.bf16.xpose.msra.mxu0 0
      %427 = vmatprep.subr.bf16.mxu0 0
      %428 = vmatpush1.bf16.xpose.msra.mxu0 0
      %429 = vmatprep.subr.bf16.mxu0 0
      %430 = vmatpush1.bf16.xpose.msra.mxu0 0
      %431 = vmatprep.subr.bf16.mxu0 0
      %432 = vmatpush1.bf16.xpose.msra.mxu0 0
      %433 = vmatprep.subr.bf16.mxu0 0
      %434 = vmatpush1.bf16.xpose.msra.mxu0 0
      %435 = vmatprep.subr.bf16.mxu0 0
      %436 = vmatpush1.bf16.xpose.msra.mxu0 0
      %437 = vmatprep.mubr.bf16.mxu0 0
      %438 = vmatmul.mubr.bf16.gmra.mrb[0].mxu0 %v400
      %v439 = vpop.f32.mrb[0].mxu0
      %v440 = vadd.f32 0.0, %v439
      %v441 = vpop.f32.mrb[0].mxu0
      %v442 = vpop.f32.mrb[0].mxu0
      %v443 = vpop.f32.mrb[0].mxu0
      %444 = vdwg.mxu0
      %v445 = vsel %vm398, %v440, -inf
      %446 = vmax.xlane.f32.xlu0 %v445
      %v447 = vpop.xlane.xlu0 %446
      %v448 = vsub.f32 %v440, %v447
      %v449 = vmul.f32 %v448, 1.442695
      %v450 = vpow.pop %v449
      %v451 = vsel %vm398, %v450, 0.0
      %452 = vadd.xlane.f32.xlu0 %v451
      %v453 = vpop.xlane.xlu0 %452
      %v454 = vrcp.pop %v453
      %v455 = vmul.f32 %v450, %v454
      %v456 = vpack.c.bf16 %v455, %v455
      %v457 = vpack.c.bf16 %v387, %v387
      %v459 = vsel %vm398, %v456, 0
      %vm461 = vcmask 1043456
      %v463 = vsel %vm461, %v457, 0
      %465 = vmatprep.subr.bf16.mxu0 0
      %466 = vmatpush1.bf16.msra.mxu0 %v463
      %467 = vmatprep.subr.bf16.mxu0 0
      %468 = vmatpush1.bf16.msra.mxu0 0
      %469 = vmatprep.subr.bf16.mxu0 0
      %470 = vmatpush1.bf16.msra.mxu0 0
      %471 = vmatprep.subr.bf16.mxu0 0
      %472 = vmatpush1.bf16.msra.mxu0 0
      %473 = vmatprep.subr.bf16.mxu0 0
      %474 = vmatpush1.bf16.msra.mxu0 0
      %475 = vmatprep.subr.bf16.mxu0 0
      %476 = vmatpush1.bf16.msra.mxu0 0
      %477 = vmatprep.subr.bf16.mxu0 0
      %478 = vmatpush1.bf16.msra.mxu0 0
      %479 = vmatprep.subr.bf16.mxu0 0
      %480 = vmatpush1.bf16.msra.mxu0 0
      %481 = vmatprep.subr.bf16.mxu0 0
      %482 = vmatpush1.bf16.msra.mxu0 0
      %483 = vmatprep.subr.bf16.mxu0 0
      %484 = vmatpush1.bf16.msra.mxu0 0
      %485 = vmatprep.subr.bf16.mxu0 0
      %486 = vmatpush1.bf16.msra.mxu0 0
      %487 = vmatprep.subr.bf16.mxu0 0
      %488 = vmatpush1.bf16.msra.mxu0 0
      %489 = vmatprep.subr.bf16.mxu0 0
      %490 = vmatpush1.bf16.msra.mxu0 0
      %491 = vmatprep.subr.bf16.mxu0 0
      %492 = vmatpush1.bf16.msra.mxu0 0
      %493 = vmatprep.subr.bf16.mxu0 0
      %494 = vmatpush1.bf16.msra.mxu0 0
      %495 = vmatprep.subr.bf16.mxu0 0
      %496 = vmatpush1.bf16.msra.mxu0 0
      %497 = vmatprep.mubr.bf16.mxu0 0
      %498 = vmatmul.mubr.bf16.gmra.mrb[0].mxu0 %v459
      %v499 = vpop.f32.mrb[0].mxu0
      %v500 = vadd.f32 0.0, %v499
      %v501 = vpop.f32.mrb[0].mxu0
      %v502 = vpop.f32.mrb[0].mxu0
      %v503 = vpop.f32.mrb[0].mxu0
      %504 = vdwg.mxu0
      %506 = vrot.lane.b32.xlu0 %v393, 120
      %v507 = vpop.permute.xlu0 %506
      %508 = vrot.lane.b32.xlu0 %v394, 88
      %v509 = vpop.permute.xlu0 %508
      %v511 = vsel %vm398, %v507, 0
      %v514 = vsel %vm398, %v509, 0
      %516 = vmatprep.subr.bf16.mxu0 0
      %517 = vmatpush1.bf16.xpose.msra.mxu0 %v514
      %518 = vmatprep.subr.bf16.mxu0 0
      %519 = vmatpush1.bf16.xpose.msra.mxu0 0
      %520 = vmatprep.subr.bf16.mxu0 0
      %521 = vmatpush1.bf16.xpose.msra.mxu0 0
      %522 = vmatprep.subr.bf16.mxu0 0
      %523 = vmatpush1.bf16.xpose.msra.mxu0 0
      %524 = vmatprep.subr.bf16.mxu0 0
      %525 = vmatpush1.bf16.xpose.msra.mxu0 0
      %526 = vmatprep.subr.bf16.mxu0 0
      %527 = vmatpush1.bf16.xpose.msra.mxu0 0
      %528 = vmatprep.subr.bf16.mxu0 0
      %529 = vmatpush1.bf16.xpose.msra.mxu0 0
      %530 = vmatprep.subr.bf16.mxu0 0
      %531 = vmatpush1.bf16.xpose.msra.mxu0 0
      %532 = vmatprep.subr.bf16.mxu0 0
      %533 = vmatpush1.bf16.xpose.msra.mxu0 0
      %534 = vmatprep.subr.bf16.mxu0 0
      %535 = vmatpush1.bf16.xpose.msra.mxu0 0
      %536 = vmatprep.subr.bf16.mxu0 0
      %537 = vmatpush1.bf16.xpose.msra.mxu0 0
      %538 = vmatprep.subr.bf16.mxu0 0
      %539 = vmatpush1.bf16.xpose.msra.mxu0 0
      %540 = vmatprep.subr.bf16.mxu0 0
      %541 = vmatpush1.bf16.xpose.msra.mxu0 0
      %542 = vmatprep.subr.bf16.mxu0 0
      %543 = vmatpush1.bf16.xpose.msra.mxu0 0
      %544 = vmatprep.subr.bf16.mxu0 0
      %545 = vmatpush1.bf16.xpose.msra.mxu0 0
      %546 = vmatprep.subr.bf16.mxu0 0
      %547 = vmatpush1.bf16.xpose.msra.mxu0 0
      %548 = vmatprep.mubr.bf16.mxu0 0
      %549 = vmatmul.mubr.bf16.gmra.mrb[0].mxu0 %v511
      %v550 = vpop.f32.mrb[0].mxu0
      %v551 = vadd.f32 0.0, %v550
      %v552 = vpop.f32.mrb[0].mxu0
      %v553 = vpop.f32.mrb[0].mxu0
      %v554 = vpop.f32.mrb[0].mxu0
      %555 = vdwg.mxu0
      %v556 = vsel %vm398, %v551, -inf
      %557 = vmax.xlane.f32.xlu0 %v556
      %v558 = vpop.xlane.xlu0 %557
      %v559 = vsub.f32 %v551, %v558
      %v560 = vmul.f32 %v559, 1.442695
      %v561 = vpow.pop %v560
      %v562 = vsel %vm398, %v561, 0.0
      %563 = vadd.xlane.f32.xlu0 %v562
      %v564 = vpop.xlane.xlu0 %563
      %v565 = vrcp.pop %v564
      %v566 = vmul.f32 %v561, %v565
      %v567 = vpack.c.bf16 %v566, %v566
      %569 = vrot.lane.b32.xlu0 %v457, 120
      %v570 = vpop.permute.xlu0 %569
      %v572 = vsel %vm398, %v567, 0
      %v575 = vsel %vm461, %v570, 0
      %577 = vmatprep.subr.bf16.mxu0 0
      %578 = vmatpush1.bf16.msra.mxu0 %v575
      %579 = vmatprep.subr.bf16.mxu0 0
      %580 = vmatpush1.bf16.msra.mxu0 0
      %581 = vmatprep.subr.bf16.mxu0 0
      %582 = vmatpush1.bf16.msra.mxu0 0
      %583 = vmatprep.subr.bf16.mxu0 0
      %584 = vmatpush1.bf16.msra.mxu0 0
      %585 = vmatprep.subr.bf16.mxu0 0
      %586 = vmatpush1.bf16.msra.mxu0 0
      %587 = vmatprep.subr.bf16.mxu0 0
      %588 = vmatpush1.bf16.msra.mxu0 0
      %589 = vmatprep.subr.bf16.mxu0 0
      %590 = vmatpush1.bf16.msra.mxu0 0
      %591 = vmatprep.subr.bf16.mxu0 0
      %592 = vmatpush1.bf16.msra.mxu0 0
      %593 = vmatprep.subr.bf16.mxu0 0
      %594 = vmatpush1.bf16.msra.mxu0 0
      %595 = vmatprep.subr.bf16.mxu0 0
      %596 = vmatpush1.bf16.msra.mxu0 0
      %597 = vmatprep.subr.bf16.mxu0 0
      %598 = vmatpush1.bf16.msra.mxu0 0
      %599 = vmatprep.subr.bf16.mxu0 0
      %600 = vmatpush1.bf16.msra.mxu0 0
      %601 = vmatprep.subr.bf16.mxu0 0
      %602 = vmatpush1.bf16.msra.mxu0 0
      %603 = vmatprep.subr.bf16.mxu0 0
      %604 = vmatpush1.bf16.msra.mxu0 0
      %605 = vmatprep.subr.bf16.mxu0 0
      %606 = vmatpush1.bf16.msra.mxu0 0
      %607 = vmatprep.subr.bf16.mxu0 0
      %608 = vmatpush1.bf16.msra.mxu0 0
      %609 = vmatprep.mubr.bf16.mxu0 0
      %610 = vmatmul.mubr.bf16.gmra.mrb[0].mxu0 %v572
      %v611 = vpop.f32.mrb[0].mxu0
      %v612 = vadd.f32 0.0, %v611
      %v613 = vpop.f32.mrb[0].mxu0
      %v614 = vpop.f32.mrb[0].mxu0
      %v615 = vpop.f32.mrb[0].mxu0
      %616 = vdwg.mxu0
      %617 = vrot.lane.b32.xlu0 %v393, 112
      %v618 = vpop.permute.xlu0 %617
      %619 = vrot.lane.b32.xlu0 %v394, 80
      %v620 = vpop.permute.xlu0 %619
      %v622 = vsel %vm398, %v618, 0
      %v625 = vsel %vm398, %v620, 0
      %627 = vmatprep.subr.bf16.mxu0 0
      %628 = vmatpush1.bf16.xpose.msra.mxu0 %v625
      %629 = vmatprep.subr.bf16.mxu0 0
      %630 = vmatpush1.bf16.xpose.msra.mxu0 0
      %631 = vmatprep.subr.bf16.mxu0 0
      %632 = vmatpush1.bf16.xpose.msra.mxu0 0
      %633 = vmatprep.subr.bf16.mxu0 0
      %634 = vmatpush1.bf16.xpose.msra.mxu0 0
      %635 = vmatprep.subr.bf16.mxu0 0
      %636 = vmatpush1.bf16.xpose.msra.mxu0 0
      %637 = vmatprep.subr.bf16.mxu0 0
      %638 = vmatpush1.bf16.xpose.msra.mxu0 0
      %639 = vmatprep.subr.bf16.mxu0 0
      %640 = vmatpush1.bf16.xpose.msra.mxu0 0
      %641 = vmatprep.subr.bf16.mxu0 0
      %642 = vmatpush1.bf16.xpose.msra.mxu0 0
      %643 = vmatprep.subr.bf16.mxu0 0
      %644 = vmatpush1.bf16.xpose.msra.mxu0 0
      %645 = vmatprep.subr.bf16.mxu0 0
      %646 = vmatpush1.bf16.xpose.msra.mxu0 0
      %647 = vmatprep.subr.bf16.mxu0 0
      %648 = vmatpush1.bf16.xpose.msra.mxu0 0
      %649 = vmatprep.subr.bf16.mxu0 0
      %650 = vmatpush1.bf16.xpose.msra.mxu0 0
      %651 = vmatprep.subr.bf16.mxu0 0
      %652 = vmatpush1.bf16.xpose.msra.mxu0 0
      %653 = vmatprep.subr.bf16.mxu0 0
      %654 = vmatpush1.bf16.xpose.msra.mxu0 0
      %655 = vmatprep.subr.bf16.mxu0 0
      %656 = vmatpush1.bf16.xpose.msra.mxu0 0
      %657 = vmatprep.subr.bf16.mxu0 0
      %658 = vmatpush1.bf16.xpose.msra.mxu0 0
      %659 = vmatprep.mubr.bf16.mxu0 0
      %660 = vmatmul.mubr.bf16.gmra.mrb[0].mxu0 %v622
      %v661 = vpop.f32.mrb[0].mxu0
      %v662 = vadd.f32 0.0, %v661
      %v663 = vpop.f32.mrb[0].mxu0
      %v664 = vpop.f32.mrb[0].mxu0
      %v665 = vpop.f32.mrb[0].mxu0
      %666 = vdwg.mxu0
      %v667 = vsel %vm398, %v662, -inf
      %668 = vmax.xlane.f32.xlu0 %v667
      %v669 = vpop.xlane.xlu0 %668
      %v670 = vsub.f32 %v662, %v669
      %v671 = vmul.f32 %v670, 1.442695
      %v672 = vpow.pop %v671
      %v673 = vsel %vm398, %v672, 0.0
      %674 = vadd.xlane.f32.xlu0 %v673
      %v675 = vpop.xlane.xlu0 %674
      %v676 = vrcp.pop %v675
      %v677 = vmul.f32 %v672, %v676
      %v678 = vpack.c.bf16 %v677, %v677
      %679 = vrot.lane.b32.xlu0 %v457, 112
      %v680 = vpop.permute.xlu0 %679
      %v682 = vsel %vm398, %v678, 0
      %v685 = vsel %vm461, %v680, 0
      %687 = vmatprep.subr.bf16.mxu0 0
      %688 = vmatpush1.bf16.msra.mxu0 %v685
      %689 = vmatprep.subr.bf16.mxu0 0
      %690 = vmatpush1.bf16.msra.mxu0 0
      %691 = vmatprep.subr.bf16.mxu0 0
      %692 = vmatpush1.bf16.msra.mxu0 0
      %693 = vmatprep.subr.bf16.mxu0 0
      %694 = vmatpush1.bf16.msra.mxu0 0
      %695 = vmatprep.subr.bf16.mxu0 0
      %696 = vmatpush1.bf16.msra.mxu0 0
      %697 = vmatprep.subr.bf16.mxu0 0
      %698 = vmatpush1.bf16.msra.mxu0 0
      %699 = vmatprep.subr.bf16.mxu0 0
      %700 = vmatpush1.bf16.msra.mxu0 0
      %701 = vmatprep.subr.bf16.mxu0 0
      %702 = vmatpush1.bf16.msra.mxu0 0
      %703 = vmatprep.subr.bf16.mxu0 0
      %704 = vmatpush1.bf16.msra.mxu0 0
      %705 = vmatprep.subr.bf16.mxu0 0
      %706 = vmatpush1.bf16.msra.mxu0 0
      %707 = vmatprep.subr.bf16.mxu0 0
      %708 = vmatpush1.bf16.msra.mxu0 0
      %709 = vmatprep.subr.bf16.mxu0 0
      %710 = vmatpush1.bf16.msra.mxu0 0
      %711 = vmatprep.subr.bf16.mxu0 0
      %712 = vmatpush1.bf16.msra.mxu0 0
      %713 = vmatprep.subr.bf16.mxu0 0
      %714 = vmatpush1.bf16.msra.mxu0 0
      %715 = vmatprep.subr.bf16.mxu0 0
      %716 = vmatpush1.bf16.msra.mxu0 0
      %717 = vmatprep.subr.bf16.mxu0 0
      %718 = vmatpush1.bf16.msra.mxu0 0
      %719 = vmatprep.mubr.bf16.mxu0 0
      %720 = vmatmul.mubr.bf16.gmra.mrb[0].mxu0 %v682
      %v721 = vpop.f32.mrb[0].mxu0
      %v722 = vadd.f32 0.0, %v721
      %v723 = vpop.f32.mrb[0].mxu0
      %v724 = vpop.f32.mrb[0].mxu0
      %v725 = vpop.f32.mrb[0].mxu0
      %726 = vdwg.mxu0
      %727 = vrot.lane.b32.xlu0 %v393, 104
      %v728 = vpop.permute.xlu0 %727
      %729 = vrot.lane.b32.xlu0 %v394, 72
      %v730 = vpop.permute.xlu0 %729
      %v732 = vsel %vm398, %v728, 0
      %v735 = vsel %vm398, %v730, 0
      %737 = vmatprep.subr.bf16.mxu0 0
      %738 = vmatpush1.bf16.xpose.msra.mxu0 %v735
      %739 = vmatprep.subr.bf16.mxu0 0
      %740 = vmatpush1.bf16.xpose.msra.mxu0 0
      %741 = vmatprep.subr.bf16.mxu0 0
      %742 = vmatpush1.bf16.xpose.msra.mxu0 0
      %743 = vmatprep.subr.bf16.mxu0 0
      %744 = vmatpush1.bf16.xpose.msra.mxu0 0
      %745 = vmatprep.subr.bf16.mxu0 0
      %746 = vmatpush1.bf16.xpose.msra.mxu0 0
      %747 = vmatprep.subr.bf16.mxu0 0
      %748 = vmatpush1.bf16.xpose.msra.mxu0 0
      %749 = vmatprep.subr.bf16.mxu0 0
      %750 = vmatpush1.bf16.xpose.msra.mxu0 0
      %751 = vmatprep.subr.bf16.mxu0 0
      %752 = vmatpush1.bf16.xpose.msra.mxu0 0
      %753 = vmatprep.subr.bf16.mxu0 0
      %754 = vmatpush1.bf16.xpose.msra.mxu0 0
      %755 = vmatprep.subr.bf16.mxu0 0
      %756 = vmatpush1.bf16.xpose.msra.mxu0 0
      %757 = vmatprep.subr.bf16.mxu0 0
      %758 = vmatpush1.bf16.xpose.msra.mxu0 0
      %759 = vmatprep.subr.bf16.mxu0 0
      %760 = vmatpush1.bf16.xpose.msra.mxu0 0
      %761 = vmatprep.subr.bf16.mxu0 0
      %762 = vmatpush1.bf16.xpose.msra.mxu0 0
      %763 = vmatprep.subr.bf16.mxu0 0
      %764 = vmatpush1.bf16.xpose.msra.mxu0 0
      %765 = vmatprep.subr.bf16.mxu0 0
      %766 = vmatpush1.bf16.xpose.msra.mxu0 0
      %767 = vmatprep.subr.bf16.mxu0 0
      %768 = vmatpush1.bf16.xpose.msra.mxu0 0
      %769 = vmatprep.mubr.bf16.mxu0 0
      %770 = vmatmul.mubr.bf16.gmra.mrb[0].mxu0 %v732
      %v771 = vpop.f32.mrb[0].mxu0
      %v772 = vadd.f32 0.0, %v771
      %v773 = vpop.f32.mrb[0].mxu0
      %v774 = vpop.f32.mrb[0].mxu0
      %v775 = vpop.f32.mrb[0].mxu0
      %776 = vdwg.mxu0
      %v777 = vsel %vm398, %v772, -inf
      %778 = vmax.xlane.f32.xlu0 %v777
      %v779 = vpop.xlane.xlu0 %778
      %v780 = vsub.f32 %v772, %v779
      %v781 = vmul.f32 %v780, 1.442695
      %v782 = vpow.pop %v781
      %v783 = vsel %vm398, %v782, 0.0
      %784 = vadd.xlane.f32.xlu0 %v783
      %v785 = vpop.xlane.xlu0 %784
      %v786 = vrcp.pop %v785
      %v787 = vmul.f32 %v782, %v786
      %v788 = vpack.c.bf16 %v787, %v787
      %789 = vrot.lane.b32.xlu0 %v457, 104
      %v790 = vpop.permute.xlu0 %789
      %v792 = vsel %vm398, %v788, 0
      %v795 = vsel %vm461, %v790, 0
      %797 = vmatprep.subr.bf16.mxu0 0
      %798 = vmatpush1.bf16.msra.mxu0 %v795
      %799 = vmatprep.subr.bf16.mxu0 0
      %800 = vmatpush1.bf16.msra.mxu0 0
      %801 = vmatprep.subr.bf16.mxu0 0
      %802 = vmatpush1.bf16.msra.mxu0 0
      %803 = vmatprep.subr.bf16.mxu0 0
      %804 = vmatpush1.bf16.msra.mxu0 0
      %805 = vmatprep.subr.bf16.mxu0 0
      %806 = vmatpush1.bf16.msra.mxu0 0
      %807 = vmatprep.subr.bf16.mxu0 0
      %808 = vmatpush1.bf16.msra.mxu0 0
      %809 = vmatprep.subr.bf16.mxu0 0
      %810 = vmatpush1.bf16.msra.mxu0 0
      %811 = vmatprep.subr.bf16.mxu0 0
      %812 = vmatpush1.bf16.msra.mxu0 0
      %813 = vmatprep.subr.bf16.mxu0 0
      %814 = vmatpush1.bf16.msra.mxu0 0
      %815 = vmatprep.subr.bf16.mxu0 0
      %816 = vmatpush1.bf16.msra.mxu0 0
      %817 = vmatprep.subr.bf16.mxu0 0
      %818 = vmatpush1.bf16.msra.mxu0 0
      %819 = vmatprep.subr.bf16.mxu0 0
      %820 = vmatpush1.bf16.msra.mxu0 0
      %821 = vmatprep.subr.bf16.mxu0 0
      %822 = vmatpush1.bf16.msra.mxu0 0
      %823 = vmatprep.subr.bf16.mxu0 0
      %824 = vmatpush1.bf16.msra.mxu0 0
      %825 = vmatprep.subr.bf16.mxu0 0
      %826 = vmatpush1.bf16.msra.mxu0 0
      %827 = vmatprep.subr.bf16.mxu0 0
      %828 = vmatpush1.bf16.msra.mxu0 0
      %829 = vmatprep.mubr.bf16.mxu0 0
      %830 = vmatmul.mubr.bf16.gmra.mrb[0].mxu0 %v792
      %v831 = vpop.f32.mrb[0].mxu0
      %v832 = vadd.f32 0.0, %v831
      %v833 = vpop.f32.mrb[0].mxu0
      %v834 = vpop.f32.mrb[0].mxu0
      %v835 = vpop.f32.mrb[0].mxu0
      %836 = vdwg.mxu0
      %838 = vrot.lane.b32.xlu0 %v612, 8
      %v839 = vpop.permute.xlu0 %838
      %842 = vrot.lane.b32.xlu0 %v722, 16
      %v843 = vpop.permute.xlu0 %842
      %846 = vrot.lane.b32.xlu0 %v832, 24
      %v847 = vpop.permute.xlu0 %846
      %v849 = vsel %vm398, %v500, %v839
      %vm850 = vcmask 130048
      %v851 = vsel %vm850, %v849, %v843
      %vm852 = vcmask 195584
      %v853 = vsel %vm852, %v851, %v847
      %v854 = vpack.c.bf16 %v853, %v853
      %v855 = vlaneseq
      %v856 = vshrl.u32 %v855, 7
      %v857 = vsub.s32 0, %v856
      %v858 = vrot.slane %v259, %v857
      %859 = vrot.lane.b32.xlu0 %v276, 32
      %v860 = vpop.permute.xlu0 %859
      %861 = vrot.lane.b32.xlu0 %v277, 32
      %v862 = vpop.permute.xlu0 %861
      %v866 = vsel %vm280, %v854, 0
      %868 = vmatprep.subr.bf16.mxu0 0
      %869 = vmatpush1.bf16.msra.mxu0 %v860
      %870 = vmatprep.subr.bf16.mxu0 0
      %871 = vmatpush1.bf16.msra.mxu0 %v862
      %872 = vmatprep.subr.bf16.mxu0 0
      %873 = vmatpush1.bf16.msra.mxu0 0
      %874 = vmatprep.subr.bf16.mxu0 0
      %875 = vmatpush1.bf16.msra.mxu0 0
      %876 = vmatprep.subr.bf16.mxu0 0
      %877 = vmatpush1.bf16.msra.mxu0 0
      %878 = vmatprep.subr.bf16.mxu0 0
      %879 = vmatpush1.bf16.msra.mxu0 0
      %880 = vmatprep.subr.bf16.mxu0 0
      %881 = vmatpush1.bf16.msra.mxu0 0
      %882 = vmatprep.subr.bf16.mxu0 0
      %883 = vmatpush1.bf16.msra.mxu0 0
      %884 = vmatprep.subr.bf16.mxu0 0
      %885 = vmatpush1.bf16.msra.mxu0 0
      %886 = vmatprep.subr.bf16.mxu0 0
      %887 = vmatpush1.bf16.msra.mxu0 0
      %888 = vmatprep.subr.bf16.mxu0 0
      %889 = vmatpush1.bf16.msra.mxu0 0
      %890 = vmatprep.subr.bf16.mxu0 0
      %891 = vmatpush1.bf16.msra.mxu0 0
      %892 = vmatprep.subr.bf16.mxu0 0
      %893 = vmatpush1.bf16.msra.mxu0 0
      %894 = vmatprep.subr.bf16.mxu0 0
      %895 = vmatpush1.bf16.msra.mxu0 0
      %896 = vmatprep.subr.bf16.mxu0 0
      %897 = vmatpush1.bf16.msra.mxu0 0
      %898 = vmatprep.subr.bf16.mxu0 0
      %899 = vmatpush1.bf16.msra.mxu0 0
      %900 = vmatprep.mubr.bf16.mxu0 0
      %901 = vmatmul.mubr.bf16.gmra.mrb[0].mxu0 %v866
      %v902 = vpop.f32.mrb[0].mxu0
      %v903 = vadd.f32 %v858, %v902
      %v904 = vpop.f32.mrb[0].mxu0
      %v905 = vpop.f32.mrb[0].mxu0
      %v906 = vpop.f32.mrb[0].mxu0
      %907 = vdwg.mxu0
      %v908 = vadd.f32 %v238, %v903
      %v909 = vsel %vm280, %v908, 0.0
      %910 = vadd.xlane.f32.xlu0 %v909
      %v911 = vpop.xlane.xlu0 %910
      %v912 = vrcp.pop 32.0
      %v913 = vmul.f32 %v911, %v912
      %v914 = vsub.f32 %v908, %v913
      %v915 = vmul.f32 %v914, %v914
      %v916 = vsel %vm280, %v915, 0.0
      %917 = vadd.xlane.f32.xlu0 %v916
      %v918 = vpop.xlane.xlu0 %917
      %v919 = vmul.f32 %v918, %v912
      %v920 = vadd.f32 %v919, 1e-05
      %v921 = vrsqrt.pop %v920
      %v922 = vmul.f32 %v914, %v921
      %v923 = vlaneseq
      %v924 = vshrl.u32 %v923, 7
      %v925 = vsub.s32 0, %v924
      %v926 = vrot.slane %v260, %v925
      %v927 = vmul.f32 %v922, %v926
      %v928 = vlaneseq
      %v929 = vshrl.u32 %v928, 7
      %v930 = vsub.s32 0, %v929
      %v931 = vrot.slane %v261, %v930
      %v932 = vadd.f32 %v927, %v931
      %v933 = vpack.c.bf16 %v932, %v932
      %v934 = vlaneseq
      %v935 = vshrl.u32 %v934, 7
      %v936 = vsub.s32 0, %v935
      %v937 = vrot.slane %v262, %v936
      %v942 = vunpack.c.l.b16 %v244
      %v943 = vunpack.c.l.b16 %v245
      %v944 = vunpack.c.l.b16 %v246
      %v945 = vunpack.c.l.b16 %v247
      %v946 = vpack.c.b16 %v943, %v942
      %v947 = vpack.c.b16 %v945, %v944
      %v951 = vsel %vm280, %v933, 0
      %953 = vmatprep.subr.bf16.mxu0 0
      %954 = vmatpush1.bf16.msra.mxu0 %v946
      %955 = vmatprep.subr.bf16.mxu0 0
      %956 = vmatpush1.bf16.msra.mxu0 %v947
      %957 = vmatprep.subr.bf16.mxu0 0
      %958 = vmatpush1.bf16.msra.mxu0 0
      %959 = vmatprep.subr.bf16.mxu0 0
      %960 = vmatpush1.bf16.msra.mxu0 0
      %961 = vmatprep.subr.bf16.mxu0 0
      %962 = vmatpush1.bf16.msra.mxu0 0
      %963 = vmatprep.subr.bf16.mxu0 0
      %964 = vmatpush1.bf16.msra.mxu0 0
      %965 = vmatprep.subr.bf16.mxu0 0
      %966 = vmatpush1.bf16.msra.mxu0 0
      %967 = vmatprep.subr.bf16.mxu0 0
      %968 = vmatpush1.bf16.msra.mxu0 0
      %969 = vmatprep.subr.bf16.mxu0 0
      %970 = vmatpush1.bf16.msra.mxu0 0
      %971 = vmatprep.subr.bf16.mxu0 0
      %972 = vmatpush1.bf16.msra.mxu0 0
      %973 = vmatprep.subr.bf16.mxu0 0
      %974 = vmatpush1.bf16.msra.mxu0 0
      %975 = vmatprep.subr.bf16.mxu0 0
      %976 = vmatpush1.bf16.msra.mxu0 0
      %977 = vmatprep.subr.bf16.mxu0 0
      %978 = vmatpush1.bf16.msra.mxu0 0
      %979 = vmatprep.subr.bf16.mxu0 0
      %980 = vmatpush1.bf16.msra.mxu0 0
      %981 = vmatprep.subr.bf16.mxu0 0
      %982 = vmatpush1.bf16.msra.mxu0 0
      %983 = vmatprep.subr.bf16.mxu0 0
      %984 = vmatpush1.bf16.msra.mxu0 0
      %985 = vmatprep.mubr.bf16.mxu0 0
      %986 = vmatmul.mubr.bf16.gmra.mrb[0].mxu0 %v951
      %v987 = vpop.f32.mrb[0].mxu0
      %v988 = vadd.f32 %v937, %v987
      %v989 = vpop.f32.mrb[0].mxu0
      %v990 = vpop.f32.mrb[0].mxu0
      %v991 = vpop.f32.mrb[0].mxu0
      %992 = vdwg.mxu0
      %v993 = vmax.f32 %v988, 0.0
      %v994 = vpack.c.bf16 %v993, %v993
      %v995 = vlaneseq
      %v996 = vshrl.u32 %v995, 7
      %v997 = vsub.s32 0, %v996
      %v998 = vrot.slane %v263, %v997
      %v1007 = vunpack.c.l.b16 %v248
      %v1008 = vunpack.c.l.b16 %v249
      %v1009 = vunpack.c.l.b16 %v250
      %v1010 = vunpack.c.l.b16 %v251
      %v1011 = vunpack.c.l.b16 %v252
      %v1012 = vunpack.c.l.b16 %v253
      %v1013 = vunpack.c.l.b16 %v254
      %v1014 = vunpack.c.l.b16 %v255
      %v1015 = vpack.c.b16 %v1008, %v1007
      %v1016 = vpack.c.b16 %v1010, %v1009
      %v1017 = vpack.c.b16 %v1012, %v1011
      %v1018 = vpack.c.b16 %v1014, %v1013
      %vm1023 = vcmask 523264
      %v1025 = vsel %vm1023, %v994, 0
      %1027 = vmatprep.subr.bf16.mxu0 0
      %1028 = vmatpush1.bf16.msra.mxu0 %v1015
      %1029 = vmatprep.subr.bf16.mxu0 0
      %1030 = vmatpush1.bf16.msra.mxu0 %v1016
      %1031 = vmatprep.subr.bf16.mxu0 0
      %1032 = vmatpush1.bf16.msra.mxu0 %v1017
      %1033 = vmatprep.subr.bf16.mxu0 0
      %1034 = vmatpush1.bf16.msra.mxu0 %v1018
      %1035 = vmatprep.subr.bf16.mxu0 0
      %1036 = vmatpush1.bf16.msra.mxu0 0
      %1037 = vmatprep.subr.bf16.mxu0 0
      %1038 = vmatpush1.bf16.msra.mxu0 0
      %1039 = vmatprep.subr.bf16.mxu0 0
      %1040 = vmatpush1.bf16.msra.mxu0 0
      %1041 = vmatprep.subr.bf16.mxu0 0
      %1042 = vmatpush1.bf16.msra.mxu0 0
      %1043 = vmatprep.subr.bf16.mxu0 0
      %1044 = vmatpush1.bf16.msra.mxu0 0
      %1045 = vmatprep.subr.bf16.mxu0 0
      %1046 = vmatpush1.bf16.msra.mxu0 0
      %1047 = vmatprep.subr.bf16.mxu0 0
      %1048 = vmatpush1.bf16.msra.mxu0 0
      %1049 = vmatprep.subr.bf16.mxu0 0
      %1050 = vmatpush1.bf16.msra.mxu0 0
      %1051 = vmatprep.subr.bf16.mxu0 0
      %1052 = vmatpush1.bf16.msra.mxu0 0
      %1053 = vmatprep.subr.bf16.mxu0 0
      %1054 = vmatpush1.bf16.msra.mxu0 0
      %1055 = vmatprep.subr.bf16.mxu0 0
      %1056 = vmatpush1.bf16.msra.mxu0 0
      %1057 = vmatprep.subr.bf16.mxu0 0
      %1058 = vmatpush1.bf16.msra.mxu0 0
      %1059 = vmatprep.mubr.bf16.mxu0 0
      %1060 = vmatmul.mubr.bf16.gmra.mrb[0].mxu0 %v1025
      %v1061 = vpop.f32.mrb[0].mxu0
      %v1062 = vadd.f32 %v998, %v1061
      %v1063 = vpop.f32.mrb[0].mxu0
      %v1064 = vpop.f32.mrb[0].mxu0
      %v1065 = vpop.f32.mrb[0].mxu0
      %1066 = vdwg.mxu0
      %v1067 = vadd.f32 %v932, %v1062
      %v1068 = vsel %vm280, %v1067, 0.0
      %1069 = vadd.xlane.f32.xlu0 %v1068
      %v1070 = vpop.xlane.xlu0 %1069
      %v1071 = vmul.f32 %v1070, %v912
      %v1072 = vsub.f32 %v1067, %v1071
      %v1073 = vmul.f32 %v1072, %v1072
      %v1074 = vsel %vm280, %v1073, 0.0
      %1075 = vadd.xlane.f32.xlu0 %v1074
      %v1076 = vpop.xlane.xlu0 %1075
      %v1077 = vmul.f32 %v1076, %v912
      %v1078 = vadd.f32 %v1077, 1e-05
      %v1079 = vrsqrt.pop %v1078
      %v1080 = vmul.f32 %v1072, %v1079
      %v1081 = vlaneseq
      %v1082 = vshrl.u32 %v1081, 7
      %v1083 = vsub.s32 0, %v1082
      %v1084 = vrot.slane %v264, %v1083
      %v1085 = vmul.f32 %v1080, %v1084
      %v1086 = vlaneseq
      %v1087 = vshrl.u32 %v1086, 7
      %v1088 = vsub.s32 0, %v1087
      %v1089 = vrot.slane %v265, %v1088
      %v1090 = vadd.f32 %v1085, %v1089
      %1091 = vst.msk [vmem:[%s236] sm:$0xff] %vm280, %v1090
      %p1092 = scmp.lt.s32.totalorder %s16, 1
      %s1093 = scalar_select %p1092, %s16, 1
      %s1094 = smul.addr %s1093, 8
      %s1095 = scalar_lea.vmem %s5, %s1094
      // Predicated region
      $region41: #{act_encoder_layer.1} parent=39 // pred_check
        %p1096 = pneg %p149
      $region42: #{act_encoder_layer.1} parent=39 // pred_check_branch
        %1098 = sbr.rel (%p1096) target = $region44
      $region43: #{act_encoder_layer.1} parent=39 // pred_region
        _
      $region44: #{act_encoder_layer.1} parent=39 // pred_fallthru
        _
    $region40: #{act_encoder_layer.1} parent=5 // pred_fallthru
      _
    %p1099 = scmp.le.s32.totalorder 2, %s11
    // Predicated region
    $region45: #{act_encoder_layer.1} parent=5 // pred_check
      %p1100 = pneg %p1099
    $region46: #{act_encoder_layer.1} parent=5 // pred_check_branch
      %1102 = sbr.rel (%p1100) target = $region48
    $region47: #{act_encoder_layer.1} parent=5 // pred_region
      %s1103 = ssub.s32 %s11, 2
      // Predicated region
      $region49: #{act_encoder_layer.1} parent=47 // pred_check
        %p1104 = pneg %p155
      $region50: #{act_encoder_layer.1} parent=47 // pred_check_branch
        %1106 = sbr.rel (%p1104) target = $region52
      $region51: #{act_encoder_layer.1} parent=47 // pred_region
        %p1107 = scmp.lt.s32.totalorder %s17, 1
        %s1108 = scalar_select %p1107, %s17, 1
        %s1109 = smul.addr %s1108, 8
        %s1110 = scalar_lea.vmem %s5, %s1109
      $region52: #{act_encoder_layer.1} parent=47 // pred_fallthru
        _
    $region48: #{act_encoder_layer.1} parent=5 // pred_fallthru
      _
  $region6: #{act_encoder_layer.1} parent=0 // loop_footer
    %s15 = sadd.s32 1, %s11
  $region7: #{act_encoder_layer.1} parent=0 // loop_footer_branch
    %10 = sbr.rel target = $region3
  $region8: #{act_encoder_layer.1} parent=0 // loop_exit
    _

</llo_original>
